<compile_context>
chip_gen: v7x
topology: tpu7x:2x2x1
jax: 0.10.0
libtpu: 0.0.40
codegen_flags: <defaults>
</compile_context>

<pallas_src>
import jax
import jax.numpy as jnp
from jax import lax
from jax.experimental import pallas as pl
from jax.experimental.pallas import tpu as pltpu


# ----------------------------- fused Pallas kernel ----------------------------

def _make_fused_kernel(n_layers, K, L_pad, Bt, D):
    """[conv1d + bias + ReLU] * n_layers -> masked-max readout, flat layout.

    Kernel args:
      x_ref    : (Bt*L_pad, C0)   embedded residues, bf16 (examples concatenated)
      mask_ref : (Bt*L_pad, 1)    1.0 where row < num_residues of its example, else 0.0
      w_i      : (K, Cin_i, Cout_i) bf16 conv weights (tap-major)
      b_i      : (1, Cout_i)        f32 bias
      g_ref    : (Bt, 1, D)         graph feature (masked max readout), f32
      h_ref    : (Bt*L_pad, D)      final hidden, bf16 (valid rows: < lengths)
    """

    def kernel(x_ref, mask_ref, *refs):
        w_refs = refs[0:2 * n_layers:2]
        b_refs = refs[1:2 * n_layers:2]
        g_ref = refs[2 * n_layers]
        h_ref = refs[2 * n_layers + 1]

        x = x_ref[...]                                     # (M, C0) bf16, stays on-chip
        acc = None
        for i in range(n_layers):
            acc = None
            for k in range(K):
                # Conv tap k == shift rows up by k (circular; equivalent to
                # pltpu.roll(x, M-k, 0)).  Wrapped / cross-example rows only land in the
                # per-example garbage zone (rows >= L_pad - n_layers*(K-1)), which the
                # mask excludes from every used output.
                xk = x if k == 0 else jnp.concatenate([x[k:], x[:k]], axis=0)
                y = jnp.dot(xk, w_refs[i][k],              # MXU, bf16 x bf16 -> f32
                            preferred_element_type=jnp.float32)
                acc = y if acc is None else acc + y
            acc = jnp.maximum(acc + b_refs[i][...], 0.0)   # bias + ReLU in f32
            if i + 1 < n_layers:
                x = acc.astype(jnp.bfloat16)               # bf16 between layers
        # Only the final hidden hits HBM, stored bf16 to halve the writeback traffic.
        h_ref[...] = acc.astype(h_ref.dtype)

        # MaxReadout over rows < num_residues.  Hidden is post-ReLU (>= 0) so masking
        # with 0 is exact (empty graph -> zero vector).  One select + one reduce.
        masked = jnp.where(mask_ref[...] > 0.0, acc, 0.0)          # (M, D) f32
        g_ref[...] = jnp.max(masked.reshape(Bt, L_pad, D), axis=1,
                             keepdims=True).astype(g_ref.dtype)    # (Bt, 1, D)

    return kernel


# ------------------------------ wrapper / tiling --------------------------------

def _round_up(x, m):
    return (x + m - 1) // m * m


def _tile_vmem_bytes(bt, L_pad, dims, K):
    """Rough per-grid-step VMEM footprint (double-buffered blocks + working set)."""
    D = dims[-1]
    n_layers = len(dims) - 1
    m = bt * L_pad
    wide = max(dims)
    b = 2 * m * dims[0] * 2                   # emb block, bf16, double-buffered
    b += 2 * m * 1 * 4                        # mask block, f32
    b += 2 * m * D * 2                        # h block, bf16
    b += 2 * bt * 1 * D * 4                   # g block, f32
    b += sum(K * dims[i] * dims[i + 1] * 2 + dims[i + 1] * 4 for i in range(n_layers))
    b += m * wide * (2 + 2 + 4)               # x (bf16) + shifted tap (bf16) + f32 acc
    return b


def _pick_batch_tile(B, L_pad, dims, K, budget_bytes=24 << 20):
    divs = [d for d in range(1, B + 1)
            if B % d == 0 and _tile_vmem_bytes(d, L_pad, dims, K) <= budget_bytes]
    if not divs:
        return 1                              # TODO(synk): sequence-axis halo tiling
    multi = [d for d in divs if B // d >= 2]  # keep >=2 grid steps for v7x's 2 TCs...
    if multi and max(multi) * L_pad >= 128:   # ...unless that starves the MXU M dim
        return max(multi)
    return max(divs)


def fused_cnn_readout(emb, weights, biases, lengths, kernel_size, *, batch_tile=None):
    """emb: (B, L, E) f32; weights[i]: (K, Cin_i, Cout_i); biases[i]: (Cout_i,);
    lengths: (B,) int32.  Returns (graph_feature (B, D) f32, hidden (B, L_pad, D) bf16);
    rows [0, lengths[b]) of hidden[b] are the valid residue features."""
    B, L, C0 = emb.shape
    K = kernel_size
    n_layers = len(weights)
    assert n_layers >= 1
    dims = [C0] + [int(w.shape[-1]) for w in weights]
    D = dims[-1]
    assert L - n_layers * (K - 1) >= 1, "sequence shorter than the receptive field"

    # Pad the sequence axis to a multiple of 16 (bf16 sublane packing) so every flat
    # (Bt*L_pad, C) block is tile aligned and the h writeback is an unmasked store.
    # Padded rows are zeros and are never observed by any used output row
    # (receptive-field argument; matches the module's padding=0 semantics).
    L_pad = _round_up(L, 16)
    if L_pad != L:
        emb = jnp.pad(emb, ((0, 0), (0, L_pad - L), (0, 0)))

    Bt = batch_tile if batch_tile is not None else _pick_batch_tile(B, L_pad, dims, K)
    assert B % Bt == 0
    est = _tile_vmem_bytes(Bt, L_pad, dims, K)
    # Explicit limit: v5e's scoped default is only 16 MiB; cap within v7x's 64 MiB.
    vmem_limit = int(min(max(2 * est, 32 << 20), 64 << 20))

    # One-time parameter / input plumbing.
    emb_flat = emb.astype(jnp.bfloat16).reshape(B * L_pad, C0)        # halves input DMA
    pos = jnp.arange(L_pad, dtype=jnp.int32)[None, :]
    mask = (pos < lengths.astype(jnp.int32)[:, None]).astype(jnp.float32)
    mask_flat = mask.reshape(B * L_pad, 1)
    w_taps = [w.astype(jnp.bfloat16) for w in weights]                # (K, Cin, Cout)
    b_rows = [b.reshape(1, -1).astype(jnp.float32) for b in biases]

    in_specs = [pl.BlockSpec((Bt * L_pad, C0), lambda i: (i, 0)),
                pl.BlockSpec((Bt * L_pad, 1), lambda i: (i, 0))]
    for w, b in zip(w_taps, b_rows):
        # Constant-index specs: weights / biases stay VMEM-resident across grid steps.
        in_specs.append(pl.BlockSpec(w.shape, lambda i: (0, 0, 0)))
        in_specs.append(pl.BlockSpec(b.shape, lambda i: (0, 0)))

    out_shape = (jax.ShapeDtypeStruct((B, 1, D), jnp.float32),
                 jax.ShapeDtypeStruct((B * L_pad, D), jnp.bfloat16))
    out_specs = (pl.BlockSpec((Bt, 1, D), lambda i: (i, 0, 0)),
                 pl.BlockSpec((Bt * L_pad, D), lambda i: (i, 0)))

    g, h = pl.pallas_call(
        _make_fused_kernel(n_layers, K, L_pad, Bt, D),
        out_shape=out_shape,
        grid_spec=pltpu.PrefetchScalarGridSpec(
            num_scalar_prefetch=0,
            grid=(B // Bt,),
            in_specs=in_specs,
            out_specs=out_specs),
        compiler_params=pltpu.CompilerParams(
            dimension_semantics=("parallel",),      # batch tiles shard across v7x TCs
            vmem_limit_bytes=vmem_limit),
    )(emb_flat, mask_flat, *[a for wb in zip(w_taps, b_rows) for a in wb])
    return g[:, 0, :], h.reshape(B, L_pad, D)


# ------------------------------ model wrapper ----------------------------------

def init_params(key, input_dim, embedding_dim, hidden_dims, kernel_size):
    dims = [embedding_dim] + list(hidden_dims)
    keys = jax.random.split(key, 1 + 2 * (len(dims) - 1))
    params = {"embed": jax.random.normal(keys[0], (input_dim, embedding_dim),
                                         jnp.float32),
              "layers": []}
    for i in range(len(dims) - 1):
        cin, cout = dims[i], dims[i + 1]
        fan_in = cin * kernel_size
        # Weight layout (K, Cin, Cout) == torch Conv1d weight (Cout, Cin, K) transposed.
        w = jax.random.normal(keys[1 + 2 * i], (kernel_size, cin, cout),
                              jnp.float32) / jnp.sqrt(fan_in)
        b = jax.random.normal(keys[2 + 2 * i], (cout,), jnp.float32) / jnp.sqrt(fan_in)
        params["layers"].append((w, b))
    return params


def cnn1d_forward(params, token_ids, num_residues, num_residues_py, kernel_size,
                  batch_tile=None):
    # nn.Embedding lookup (gather glue).
    emb = jnp.take(params["embed"], token_ids, axis=0)        # (B, L, E) f32

    # short_cut / concat_hidden default to False; with padding=0 the per-layer lengths
    # differ so short_cut can never trigger anyway.
    # TODO(synk): concat_hidden=True and sum/mean/attention readouts are not fused.
    # TODO(synk): like the torch module with padding=0, this requires
    #             num_residues <= L - n_layers*(K-1); larger values silently clamp.
    weights = [w for (w, _) in params["layers"]]
    biases = [b for (_, b) in params["layers"]]

    graph_feature, hidden = fused_cnn_readout(
        emb, weights, biases, num_residues, kernel_size, batch_tile=batch_tile)

    # padded_to_variadic (host/JAX glue).  Kernel stores hidden in bf16 to halve the
    # HBM writeback; upcast here to keep the module's f32 output contract.
    residue_feature = jnp.concatenate(
        [hidden[i, :num_residues_py[i]] for i in range(hidden.shape[0])],
        axis=0).astype(jnp.float32)
    return {"graph_feature": graph_feature, "residue_feature": residue_feature}


# ----------------------------------- main ---------------------------------------

if __name__ == "__main__":
    # Module config: input_dim=21 (residue vocab), embedding_dim=128 (module default),
    # hidden_dims=[128, 128], kernel_size=3, stride=1, padding=0, relu, readout='max'.
    input_dim = 21
    embedding_dim = 128
    hidden_dims = [128, 128]
    kernel_size = 3
    padding_id = input_dim - 1

    B, L = 16, 12                      # L pads to 16; num_residues <= L - 4 = 8
    key = jax.random.PRNGKey(0)
    k_tok, k_par, k_len = jax.random.split(key, 3)

    num_residues = jax.random.randint(k_len, (B,), 3, 9, dtype=jnp.int32)   # 3..8
    num_residues_py = [int(v) for v in jax.device_get(num_residues)]
    assert max(num_residues_py) <= L - len(hidden_dims) * (kernel_size - 1)

    params = init_params(k_par, input_dim, embedding_dim, hidden_dims, kernel_size)

    # variadic_to_padded: pad token ids with padding_id beyond each graph's length.
    token_ids = jax.random.randint(k_tok, (B, L), 0, input_dim, dtype=jnp.int32)
    pos = jnp.arange(L)[None, :]
    token_ids = jnp.where(pos < num_residues[:, None], token_ids, padding_id)

    out = cnn1d_forward(params, token_ids, num_residues, num_residues_py, kernel_size)
    out = jax.tree_util.tree_map(jax.block_until_ready, out)

    # Pure-JAX reference using the same arithmetic as the kernel (bf16 operands and
    # inter-layer activations, f32 accumulation / bias / ReLU / readout).
    x = jnp.take(params["embed"], token_ids, axis=0).astype(jnp.bfloat16)
    n_layers = len(params["layers"])
    for li, (w, b) in enumerate(params["layers"]):
        y = lax.conv_general_dilated(
            x.astype(jnp.bfloat16), w.astype(jnp.bfloat16),
            window_strides=(1,), padding="VALID",
            dimension_numbers=("NWC", "WIO", "NWC"),
            preferred_element_type=jnp.float32)
        y = jnp.maximum(y + b, 0.0)
        x = y.astype(jnp.bfloat16) if li + 1 < n_layers else y
    hid_f32 = x                                              # (B, L - 2*(K-1), D) f32
    ref_graph = jnp.stack(
        [jnp.max(hid_f32[i, :num_residues_py[i]], axis=0) for i in range(B)], axis=0)
    hid_bf16 = hid_f32.astype(jnp.bfloat16).astype(jnp.float32)   # kernel stores bf16
    ref_nodes = jnp.concatenate(
        [hid_bf16[i, :num_residues_py[i]] for i in range(B)], axis=0)

    assert out["graph_feature"].shape == (B, hidden_dims[-1])
    assert out["residue_feature"].shape == ref_nodes.shape
    assert jnp.allclose(out["graph_feature"], ref_graph, atol=5e-3, rtol=5e-3)
    assert jnp.allclose(out["residue_feature"], ref_nodes, atol=2e-2, rtol=2e-2)

    print("KERNEL_OK")
</pallas_src>

<mosaic_0001>
module attributes {stable_mosaic.version = 11 : i64} {
  func.func @kernel(%arg0: i32, %arg1: memref<128x128xbf16, #tpu.memory_space<vmem>>, %arg2: memref<128x1xf32, #tpu.memory_space<vmem>>, %arg3: memref<3x128x128xbf16, #tpu.memory_space<vmem>>, %arg4: memref<1x128xf32, #tpu.memory_space<vmem>>, %arg5: memref<3x128x128xbf16, #tpu.memory_space<vmem>>, %arg6: memref<1x128xf32, #tpu.memory_space<vmem>>, %arg7: memref<8x1x128xf32, #tpu.memory_space<vmem>>, %arg8: memref<128x128xbf16, #tpu.memory_space<vmem>>) attributes {dimension_semantics = [#tpu.dimension_semantics<parallel>], iteration_bounds = array<i64: 2>, scalar_prefetch = 0 : i64, scratch_operands = 0 : i64, tpu.core_type = #tpu.core_type<tc>, window_params = [{transform_indices = @transform_0, window_bounds = array<i64: 128, 128>}, {transform_indices = @transform_1, window_bounds = array<i64: 128, 1>}, {pipeline_mode = #tpu.pipeline_mode<synchronous>, transform_indices = @transform_2, window_bounds = array<i64: 3, 128, 128>}, {pipeline_mode = #tpu.pipeline_mode<synchronous>, transform_indices = @transform_3, window_bounds = array<i64: 1, 128>}, {pipeline_mode = #tpu.pipeline_mode<synchronous>, transform_indices = @transform_4, window_bounds = array<i64: 3, 128, 128>}, {pipeline_mode = #tpu.pipeline_mode<synchronous>, transform_indices = @transform_5, window_bounds = array<i64: 1, 128>}, {transform_indices = @transform_6, window_bounds = array<i64: 8, 1, 128>}, {transform_indices = @transform_7, window_bounds = array<i64: 128, 128>}]} {
    %c0 = arith.constant 0 : index
    %c0_0 = arith.constant 0 : index
    %0 = vector.load %arg1[%c0, %c0_0] : memref<128x128xbf16, #tpu.memory_space<vmem>>, vector<128x128xbf16>
    %c0_1 = arith.constant 0 : index
    %c0_2 = arith.constant 0 : index
    %c0_3 = arith.constant 0 : index
    %1 = vector.load %arg3[%c0_1, %c0_2, %c0_3] : memref<3x128x128xbf16, #tpu.memory_space<vmem>>, vector<1x128x128xbf16>
    %2 = vector.shape_cast %1 : vector<1x128x128xbf16> to vector<128x128xbf16>
    %cst = arith.constant dense<0.000000e+00> : vector<128x128xf32>
    %3 = tpu.matmul %0, %2, %cst {dimension_numbers = #tpu.dot_dimension_numbers<[1], [0], [0], [1], [0, 0, 1, 1], [], []>} : vector<128x128xbf16>, vector<128x128xbf16>, vector<128x128xf32> -> vector<128x128xf32>
    %4 = vector.extract_strided_slice %0 {offsets = [1, 0], sizes = [127, 128], strides = [1, 1]} : vector<128x128xbf16> to vector<127x128xbf16>
    %5 = vector.extract_strided_slice %0 {offsets = [0, 0], sizes = [1, 128], strides = [1, 1]} : vector<128x128xbf16> to vector<1x128xbf16>
    %6 = tpu.concatenate %4, %5 in 0 : vector<127x128xbf16>, vector<1x128xbf16> -> vector<128x128xbf16>
    %c1 = arith.constant 1 : index
    %c0_4 = arith.constant 0 : index
    %c0_5 = arith.constant 0 : index
    %7 = vector.load %arg3[%c1, %c0_4, %c0_5] : memref<3x128x128xbf16, #tpu.memory_space<vmem>>, vector<1x128x128xbf16>
    %8 = vector.shape_cast %7 : vector<1x128x128xbf16> to vector<128x128xbf16>
    %cst_6 = arith.constant dense<0.000000e+00> : vector<128x128xf32>
    %9 = tpu.matmul %6, %8, %cst_6 {dimension_numbers = #tpu.dot_dimension_numbers<[1], [0], [0], [1], [0, 0, 1, 1], [], []>} : vector<128x128xbf16>, vector<128x128xbf16>, vector<128x128xf32> -> vector<128x128xf32>
    %10 = arith.addf %3, %9 : vector<128x128xf32>
    %11 = vector.extract_strided_slice %0 {offsets = [2, 0], sizes = [126, 128], strides = [1, 1]} : vector<128x128xbf16> to vector<126x128xbf16>
    %12 = vector.extract_strided_slice %0 {offsets = [0, 0], sizes = [2, 128], strides = [1, 1]} : vector<128x128xbf16> to vector<2x128xbf16>
    %13 = tpu.concatenate %11, %12 in 0 : vector<126x128xbf16>, vector<2x128xbf16> -> vector<128x128xbf16>
    %c2 = arith.constant 2 : index
    %c0_7 = arith.constant 0 : index
    %c0_8 = arith.constant 0 : index
    %14 = vector.load %arg3[%c2, %c0_7, %c0_8] : memref<3x128x128xbf16, #tpu.memory_space<vmem>>, vector<1x128x128xbf16>
    %15 = vector.shape_cast %14 : vector<1x128x128xbf16> to vector<128x128xbf16>
    %cst_9 = arith.constant dense<0.000000e+00> : vector<128x128xf32>
    %16 = tpu.matmul %13, %15, %cst_9 {dimension_numbers = #tpu.dot_dimension_numbers<[1], [0], [0], [1], [0, 0, 1, 1], [], []>} : vector<128x128xbf16>, vector<128x128xbf16>, vector<128x128xf32> -> vector<128x128xf32>
    %17 = arith.addf %10, %16 : vector<128x128xf32>
    %c0_10 = arith.constant 0 : index
    %c0_11 = arith.constant 0 : index
    %18 = vector.load %arg4[%c0_10, %c0_11] : memref<1x128xf32, #tpu.memory_space<vmem>>, vector<1x128xf32>
    %19 = vector.broadcast %18 : vector<1x128xf32> to vector<128x128xf32>
    %20 = arith.addf %17, %19 : vector<128x128xf32>
    %cst_12 = arith.constant 0.000000e+00 : f32
    %21 = vector.broadcast %cst_12 : f32 to vector<128x128xf32>
    %22 = arith.maximumf %20, %21 : vector<128x128xf32>
    %23 = arith.truncf %22 : vector<128x128xf32> to vector<128x128xbf16>
    %c0_13 = arith.constant 0 : index
    %c0_14 = arith.constant 0 : index
    %c0_15 = arith.constant 0 : index
    %24 = vector.load %arg5[%c0_13, %c0_14, %c0_15] : memref<3x128x128xbf16, #tpu.memory_space<vmem>>, vector<1x128x128xbf16>
    %25 = vector.shape_cast %24 : vector<1x128x128xbf16> to vector<128x128xbf16>
    %cst_16 = arith.constant dense<0.000000e+00> : vector<128x128xf32>
    %26 = tpu.matmul %23, %25, %cst_16 {dimension_numbers = #tpu.dot_dimension_numbers<[1], [0], [0], [1], [0, 0, 1, 1], [], []>} : vector<128x128xbf16>, vector<128x128xbf16>, vector<128x128xf32> -> vector<128x128xf32>
    %27 = vector.extract_strided_slice %23 {offsets = [1, 0], sizes = [127, 128], strides = [1, 1]} : vector<128x128xbf16> to vector<127x128xbf16>
    %28 = vector.extract_strided_slice %23 {offsets = [0, 0], sizes = [1, 128], strides = [1, 1]} : vector<128x128xbf16> to vector<1x128xbf16>
    %29 = tpu.concatenate %27, %28 in 0 : vector<127x128xbf16>, vector<1x128xbf16> -> vector<128x128xbf16>
    %c1_17 = arith.constant 1 : index
    %c0_18 = arith.constant 0 : index
    %c0_19 = arith.constant 0 : index
    %30 = vector.load %arg5[%c1_17, %c0_18, %c0_19] : memref<3x128x128xbf16, #tpu.memory_space<vmem>>, vector<1x128x128xbf16>
    %31 = vector.shape_cast %30 : vector<1x128x128xbf16> to vector<128x128xbf16>
    %cst_20 = arith.constant dense<0.000000e+00> : vector<128x128xf32>
    %32 = tpu.matmul %29, %31, %cst_20 {dimension_numbers = #tpu.dot_dimension_numbers<[1], [0], [0], [1], [0, 0, 1, 1], [], []>} : vector<128x128xbf16>, vector<128x128xbf16>, vector<128x128xf32> -> vector<128x128xf32>
    %33 = arith.addf %26, %32 : vector<128x128xf32>
    %34 = vector.extract_strided_slice %23 {offsets = [2, 0], sizes = [126, 128], strides = [1, 1]} : vector<128x128xbf16> to vector<126x128xbf16>
    %35 = vector.extract_strided_slice %23 {offsets = [0, 0], sizes = [2, 128], strides = [1, 1]} : vector<128x128xbf16> to vector<2x128xbf16>
    %36 = tpu.concatenate %34, %35 in 0 : vector<126x128xbf16>, vector<2x128xbf16> -> vector<128x128xbf16>
    %c2_21 = arith.constant 2 : index
    %c0_22 = arith.constant 0 : index
    %c0_23 = arith.constant 0 : index
    %37 = vector.load %arg5[%c2_21, %c0_22, %c0_23] : memref<3x128x128xbf16, #tpu.memory_space<vmem>>, vector<1x128x128xbf16>
    %38 = vector.shape_cast %37 : vector<1x128x128xbf16> to vector<128x128xbf16>
    %cst_24 = arith.constant dense<0.000000e+00> : vector<128x128xf32>
    %39 = tpu.matmul %36, %38, %cst_24 {dimension_numbers = #tpu.dot_dimension_numbers<[1], [0], [0], [1], [0, 0, 1, 1], [], []>} : vector<128x128xbf16>, vector<128x128xbf16>, vector<128x128xf32> -> vector<128x128xf32>
    %40 = arith.addf %33, %39 : vector<128x128xf32>
    %c0_25 = arith.constant 0 : index
    %c0_26 = arith.constant 0 : index
    %41 = vector.load %arg6[%c0_25, %c0_26] : memref<1x128xf32, #tpu.memory_space<vmem>>, vector<1x128xf32>
    %42 = vector.broadcast %41 : vector<1x128xf32> to vector<128x128xf32>
    %43 = arith.addf %40, %42 : vector<128x128xf32>
    %cst_27 = arith.constant 0.000000e+00 : f32
    %44 = vector.broadcast %cst_27 : f32 to vector<128x128xf32>
    %45 = arith.maximumf %43, %44 : vector<128x128xf32>
    %46 = arith.truncf %45 : vector<128x128xf32> to vector<128x128xbf16>
    %c0_28 = arith.constant 0 : index
    %c0_29 = arith.constant 0 : index
    %47 = vector.load %arg8[%c0_28, %c0_29] : memref<128x128xbf16, #tpu.memory_space<vmem>>, vector<128x128xbf16>
    tpu.vector_store %arg8[%c0_28, %c0_29], %46 {strides = array<i32>} : memref<128x128xbf16, #tpu.memory_space<vmem>>, vector<128x128xbf16>,
    %c0_30 = arith.constant 0 : index
    %c0_31 = arith.constant 0 : index
    %48 = vector.load %arg2[%c0_30, %c0_31] : memref<128x1xf32, #tpu.memory_space<vmem>>, vector<128x1xf32>
    %cst_32 = arith.constant 0.000000e+00 : f32
    %49 = vector.broadcast %cst_32 : f32 to vector<128x1xf32>
    %50 = arith.cmpf ogt, %48, %49 : vector<128x1xf32>
    %cst_33 = arith.constant 0.000000e+00 : f32
    %51 = vector.shape_cast %50 : vector<128x1xi1> to vector<128x1xi1>
    %52 = vector.broadcast %51 : vector<128x1xi1> to vector<128x128xi1>
    %53 = vector.broadcast %cst_33 : f32 to vector<128x128xf32>
    %54 = arith.select %52, %45, %53 : vector<128x128xi1>, vector<128x128xf32>
    %55 = vector.shape_cast %54 : vector<128x128xf32> to vector<8x16x128xf32>
    %cst_34 = arith.constant dense<0xFF800000> : vector<8x128xf32>
    %56 = vector.multi_reduction <maximumf>, %55, %cst_34 [1] : vector<8x16x128xf32> to vector<8x128xf32>
    %57 = vector.shape_cast %56 : vector<8x128xf32> to vector<8x1x128xf32>
    %c0_35 = arith.constant 0 : index
    %c0_36 = arith.constant 0 : index
    %c0_37 = arith.constant 0 : index
    %58 = vector.load %arg7[%c0_35, %c0_36, %c0_37] : memref<8x1x128xf32, #tpu.memory_space<vmem>>, vector<8x1x128xf32>
    tpu.vector_store %arg7[%c0_35, %c0_36, %c0_37], %57 {strides = array<i32>} : memref<8x1x128xf32, #tpu.memory_space<vmem>>, vector<8x1x128xf32>,
    return
  }
  func.func @transform_0(%arg0: i32) -> (i32, i32) {
    %c0_i32 = arith.constant 0 : i32
    %c0_i32_0 = arith.constant 0 : i32
    return %arg0, %c0_i32 : i32, i32
  }
  func.func @transform_1(%arg0: i32) -> (i32, i32) {
    %c0_i32 = arith.constant 0 : i32
    %c0_i32_0 = arith.constant 0 : i32
    return %arg0, %c0_i32 : i32, i32
  }
  func.func @transform_2(%arg0: i32) -> (i32, i32, i32) {
    %c0_i32 = arith.constant 0 : i32
    %c0_i32_0 = arith.constant 0 : i32
    %c0_i32_1 = arith.constant 0 : i32
    %c0_i32_2 = arith.constant 0 : i32
    return %c0_i32, %c0_i32_0, %c0_i32_1 : i32, i32, i32
  }
  func.func @transform_3(%arg0: i32) -> (i32, i32) {
    %c0_i32 = arith.constant 0 : i32
    %c0_i32_0 = arith.constant 0 : i32
    %c0_i32_1 = arith.constant 0 : i32
    return %c0_i32, %c0_i32_0 : i32, i32
  }
  func.func @transform_4(%arg0: i32) -> (i32, i32, i32) {
    %c0_i32 = arith.constant 0 : i32
    %c0_i32_0 = arith.constant 0 : i32
    %c0_i32_1 = arith.constant 0 : i32
    %c0_i32_2 = arith.constant 0 : i32
    return %c0_i32, %c0_i32_0, %c0_i32_1 : i32, i32, i32
  }
  func.func @transform_5(%arg0: i32) -> (i32, i32) {
    %c0_i32 = arith.constant 0 : i32
    %c0_i32_0 = arith.constant 0 : i32
    %c0_i32_1 = arith.constant 0 : i32
    return %c0_i32, %c0_i32_0 : i32, i32
  }
  func.func @transform_6(%arg0: i32) -> (i32, i32, i32) {
    %c0_i32 = arith.constant 0 : i32
    %c0_i32_0 = arith.constant 0 : i32
    %c0_i32_1 = arith.constant 0 : i32
    return %arg0, %c0_i32, %c0_i32_0 : i32, i32, i32
  }
  func.func @transform_7(%arg0: i32) -> (i32, i32) {
    %c0_i32 = arith.constant 0 : i32
    %c0_i32_0 = arith.constant 0 : i32
    return %arg0, %c0_i32 : i32, i32
  }
}

</mosaic_0001>

<llo_original>
// kernel: tpu_custom_call.1
$region0: #{tpu_custom_call.1}
  #allocation0 [shape = 'u32[]', space=smem, size = 0x4, offset = 0x4, fixed_abs, tag = 'smem constant byte address 0x4 - core index']
  #allocation1 [shape = 'u32[144,128]{1,0:T(1,128)}', space=vmem, size = 0x12000, scoped, tag = 'internal scratch']
  %s0 = inlined_call_operand.hbm [shape: bf16[256,128], index: 0, kind: input, shape index: {}]
  %s1 = inlined_call_operand.vmem [shape: f32[256,1], index: 1, kind: input, shape index: {}]
  %s2 = inlined_call_operand.vmem [shape: bf16[3,128,128], index: 2, kind: input, shape index: {}]
  %s3 = inlined_call_operand.vmem [shape: f32[1,128], index: 3, kind: input, shape index: {}]
  %s4 = inlined_call_operand.hbm [shape: bf16[3,128,128], index: 4, kind: input, shape index: {}]
  %s5 = inlined_call_operand.vmem [shape: f32[1,128], index: 5, kind: input, shape index: {}]
  %s6 = inlined_call_operand.hbm [shape: f32[16,1,128], index: 6, kind: output, shape index: {0}]
  %s7 = inlined_call_operand.hbm [shape: bf16[256,128], index: 7, kind: output, shape index: {1}]
  %8 = xla_tuple %s6, %s7
  %s9 = sld [smem:[#allocation0]]
  $region73: #{tpu_custom_call.1} parent=0
    _
  %s11 = ssub.s32 1, %s9
  %s12 = scalar_select 0, %s11, %s9
  $region1: #{tpu_custom_call.1} parent=0
    #allocation2 [shape = 'u8[65536]{0}', space=vmem, size = 0x10000, scoped, tag = 'input window, operand 0']
    #allocation3 [shape = 's32[2]{0}', space=sflag, size = 0x8, scoped, tag = 'scoped memory for tpu_custom_call.1']
    #allocation4 [shape = 's32[2]{0}', space=sflag, size = 0x8, scoped, tag = 'scoped memory for tpu_custom_call.1']
    #allocation5 [shape = 'u8[98304]{0}', space=vmem, size = 0x18000, scoped, tag = 'input window, operand 4, single buffered']
    #allocation6 [shape = 's32[1]{0}', space=sflag, size = 0x4, scoped, tag = 'scoped memory for tpu_custom_call.1']
    #allocation7 [shape = 'u8[8192]{0}', space=vmem, size = 0x2000, scoped, tag = 'output window, operand 0']
    #allocation8 [shape = 'u8[65536]{0}', space=vmem, size = 0x10000, scoped, tag = 'output window, operand 1']
    #allocation9 [shape = 's32[2]{0}', space=sflag, size = 0x8, scoped, tag = 'scoped memory for tpu_custom_call.1']
    %13 = vsyncpa [#allocation3], 0
    %s14 = scalar_lea.sflag [#allocation3], 1
    %15 = vsyncpa %s14, 0
    %16 = vsyncpa [#allocation6], 0
    %17 = vsyncpa [#allocation4], 0
    %s18 = scalar_lea.sflag [#allocation4], 1
    %19 = vsyncpa %s18, 0
    %20 = vsyncpa [#allocation9], 0
    %s21 = scalar_lea.sflag [#allocation9], 1
    %22 = vsyncpa %s21, 0
    loop: start=0, step=1, limit=4
    $region2: #{tpu_custom_call.1} parent=1 // loop_pre_header
      _
    $region3: #{tpu_custom_call.1} parent=1 // loop_header
      %s24 = sphi 0, %s28
      %p25 = scmp.ge.s32.totalorder %s24, 4
      %s34 = sphi 0, %s36
      %s37 = sphi 0, %s34
      %s38 = sphi 0, %s37
      %s54 = sphi 0, %s38
      %s60 = sphi 0, %s62
      %s63 = sphi 0, %s60
      %s64 = sphi 0, %s63
      %s80 = sphi 0, %s64
      %s84 = sphi 0, %s84
      %s86 = sphi 0, %s84
      %s87 = sphi 0, %s86
      %s101 = sphi 0, %s87
      %s105 = sphi 0, %s105
      %s107 = sphi 0, %s105
      %s108 = sphi 0, %s107
      %s122 = sphi 0, %s108
      %s126 = sphi 0, %s126
      %s128 = sphi 0, %s126
      %s129 = sphi 0, %s128
      %s143 = sphi 0, %s129
      %s147 = sphi 0, %s147
      %s149 = sphi 0, %s147
      %s150 = sphi 0, %s149
      %s164 = sphi 0, %s150
      %s170 = sphi 0, %s172
      %s173 = sphi 0, %s170
      %s174 = sphi 0, %s173
      %s190 = sphi 0, %s174
      %s196 = sphi 0, %s198
      %s199 = sphi 0, %s196
      %s200 = sphi 0, %s199
      %s216 = sphi 0, %s200
    $region4: #{tpu_custom_call.1} parent=1 // loop_header_branch
      %27 = sbr.rel (%p25) target = $region8
    $region5: #{tpu_custom_call.1} parent=1 // loop_body
      %s29 = ssub.s32 %s24, 1
      %s30 = ssub.s32 %s24, 2
      %s31 = sadd.s32 %s24, 1
      %s32 = ssub.s32 %s24, %s31
      %p33 = scmp.eq.s32.totalorder %s32, 0
      %s35 = sadd.s32 %s34, 1
      %s36 = scalar_select %p33, %s34, %s35
      %p39 = pneg %p33
      %p40 = scmp.eq.s32.totalorder %s24, 1
      %p41 = por %p39, %p40
      %p42 = scmp.ne.s32.totalorder %s34, %s37
      %p43 = scmp.eq.s32.totalorder %s24, 0
      %p44 = por %p42, %p43
      %p45 = scmp.ne.s32.totalorder %s34, %s37
      %p46 = scmp.eq.s32.totalorder %s29, 1
      %p47 = por %p45, %p46
      %p48 = scmp.ne.s32.totalorder %s37, %s38
      %p49 = scmp.eq.s32.totalorder %s29, 0
      %p50 = por %p48, %p49
      %p51 = scmp.ne.s32.totalorder %s37, %s38
      %p52 = scmp.eq.s32.totalorder %s30, 1
      %p53 = por %p51, %p52
      %p55 = scmp.ne.s32.totalorder %s38, %s54
      %p56 = scmp.eq.s32.totalorder %s30, 0
      %p57 = por %p55, %p56
      %s58 = ssub.s32 %s24, %s31
      %p59 = scmp.eq.s32.totalorder %s58, 0
      %s61 = sadd.s32 %s60, 1
      %s62 = scalar_select %p59, %s60, %s61
      %p65 = pneg %p59
      %p66 = scmp.eq.s32.totalorder %s24, 1
      %p67 = por %p65, %p66
      %p68 = scmp.ne.s32.totalorder %s60, %s63
      %p69 = scmp.eq.s32.totalorder %s24, 0
      %p70 = por %p68, %p69
      %p71 = scmp.ne.s32.totalorder %s60, %s63
      %p72 = scmp.eq.s32.totalorder %s29, 1
      %p73 = por %p71, %p72
      %p74 = scmp.ne.s32.totalorder %s63, %s64
      %p75 = scmp.eq.s32.totalorder %s29, 0
      %p76 = por %p74, %p75
      %p77 = scmp.ne.s32.totalorder %s63, %s64
      %p78 = scmp.eq.s32.totalorder %s30, 1
      %p79 = por %p77, %p78
      %p81 = scmp.ne.s32.totalorder %s64, %s80
      %p82 = scmp.eq.s32.totalorder %s30, 0
      %p83 = por %p81, %p82
      %s85 = sadd.s32 %s84, 1
      %p88 = scmp.eq.s32.totalorder %s24, 1
      %p89 = scmp.ne.s32.totalorder %s84, %s86
      %p90 = scmp.eq.s32.totalorder %s24, 0
      %p91 = por %p89, %p90
      %p92 = scmp.ne.s32.totalorder %s84, %s86
      %p93 = scmp.eq.s32.totalorder %s29, 1
      %p94 = por %p92, %p93
      %p95 = scmp.ne.s32.totalorder %s86, %s87
      %p96 = scmp.eq.s32.totalorder %s29, 0
      %p97 = por %p95, %p96
      %p98 = scmp.ne.s32.totalorder %s86, %s87
      %p99 = scmp.eq.s32.totalorder %s30, 1
      %p100 = por %p98, %p99
      %p102 = scmp.ne.s32.totalorder %s87, %s101
      %p103 = scmp.eq.s32.totalorder %s30, 0
      %p104 = por %p102, %p103
      %s106 = sadd.s32 %s105, 1
      %p109 = scmp.eq.s32.totalorder %s24, 1
      %p110 = scmp.ne.s32.totalorder %s105, %s107
      %p111 = scmp.eq.s32.totalorder %s24, 0
      %p112 = por %p110, %p111
      %p113 = scmp.ne.s32.totalorder %s105, %s107
      %p114 = scmp.eq.s32.totalorder %s29, 1
      %p115 = por %p113, %p114
      %p116 = scmp.ne.s32.totalorder %s107, %s108
      %p117 = scmp.eq.s32.totalorder %s29, 0
      %p118 = por %p116, %p117
      %p119 = scmp.ne.s32.totalorder %s107, %s108
      %p120 = scmp.eq.s32.totalorder %s30, 1
      %p121 = por %p119, %p120
      %p123 = scmp.ne.s32.totalorder %s108, %s122
      %p124 = scmp.eq.s32.totalorder %s30, 0
      %p125 = por %p123, %p124
      %s127 = sadd.s32 %s126, 1
      %p130 = scmp.eq.s32.totalorder %s24, 1
      %p131 = scmp.ne.s32.totalorder %s126, %s128
      %p132 = scmp.eq.s32.totalorder %s24, 0
      %p133 = por %p131, %p132
      %p134 = scmp.ne.s32.totalorder %s126, %s128
      %p135 = scmp.eq.s32.totalorder %s29, 1
      %p136 = por %p134, %p135
      %p137 = scmp.ne.s32.totalorder %s128, %s129
      %p138 = scmp.eq.s32.totalorder %s29, 0
      %p139 = por %p137, %p138
      %p140 = scmp.ne.s32.totalorder %s128, %s129
      %p141 = scmp.eq.s32.totalorder %s30, 1
      %p142 = por %p140, %p141
      %p144 = scmp.ne.s32.totalorder %s129, %s143
      %p145 = scmp.eq.s32.totalorder %s30, 0
      %p146 = por %p144, %p145
      %s148 = sadd.s32 %s147, 1
      %p151 = scmp.eq.s32.totalorder %s24, 1
      %p152 = scmp.ne.s32.totalorder %s147, %s149
      %p153 = scmp.eq.s32.totalorder %s24, 0
      %p154 = por %p152, %p153
      %p155 = scmp.ne.s32.totalorder %s147, %s149
      %p156 = scmp.eq.s32.totalorder %s29, 1
      %p157 = por %p155, %p156
      %p158 = scmp.ne.s32.totalorder %s149, %s150
      %p159 = scmp.eq.s32.totalorder %s29, 0
      %p160 = por %p158, %p159
      %p161 = scmp.ne.s32.totalorder %s149, %s150
      %p162 = scmp.eq.s32.totalorder %s30, 1
      %p163 = por %p161, %p162
      %p165 = scmp.ne.s32.totalorder %s150, %s164
      %p166 = scmp.eq.s32.totalorder %s30, 0
      %p167 = por %p165, %p166
      %s168 = ssub.s32 %s24, %s31
      %p169 = scmp.eq.s32.totalorder %s168, 0
      %s171 = sadd.s32 %s170, 1
      %s172 = scalar_select %p169, %s170, %s171
      %p175 = pneg %p169
      %p176 = scmp.eq.s32.totalorder %s24, 1
      %p177 = por %p175, %p176
      %p178 = scmp.ne.s32.totalorder %s170, %s173
      %p179 = scmp.eq.s32.totalorder %s24, 0
      %p180 = por %p178, %p179
      %p181 = scmp.ne.s32.totalorder %s170, %s173
      %p182 = scmp.eq.s32.totalorder %s29, 1
      %p183 = por %p181, %p182
      %p184 = scmp.ne.s32.totalorder %s173, %s174
      %p185 = scmp.eq.s32.totalorder %s29, 0
      %p186 = por %p184, %p185
      %p187 = scmp.ne.s32.totalorder %s173, %s174
      %p188 = scmp.eq.s32.totalorder %s30, 1
      %p189 = por %p187, %p188
      %p191 = scmp.ne.s32.totalorder %s174, %s190
      %p192 = scmp.eq.s32.totalorder %s30, 0
      %p193 = por %p191, %p192
      %s194 = ssub.s32 %s24, %s31
      %p195 = scmp.eq.s32.totalorder %s194, 0
      %s197 = sadd.s32 %s196, 1
      %s198 = scalar_select %p195, %s196, %s197
      %p201 = pneg %p195
      %p202 = scmp.eq.s32.totalorder %s24, 1
      %p203 = por %p201, %p202
      %p204 = scmp.ne.s32.totalorder %s196, %s199
      %p205 = scmp.eq.s32.totalorder %s24, 0
      %p206 = por %p204, %p205
      %p207 = scmp.ne.s32.totalorder %s196, %s199
      %p208 = scmp.eq.s32.totalorder %s29, 1
      %p209 = por %p207, %p208
      %p210 = scmp.ne.s32.totalorder %s199, %s200
      %p211 = scmp.eq.s32.totalorder %s29, 0
      %p212 = por %p210, %p211
      %p213 = scmp.ne.s32.totalorder %s199, %s200
      %p214 = scmp.eq.s32.totalorder %s30, 1
      %p215 = por %p213, %p214
      %p217 = scmp.ne.s32.totalorder %s200, %s216
      %p218 = scmp.eq.s32.totalorder %s30, 0
      %p219 = por %p217, %p218
      %p220 = scmp.le.s32.totalorder 1, %s24
      %p221 = scmp.lt.s32.totalorder %s24, 3
      %p222 = pnand %p220, %p221
      %p223 = pneg %p222
      // Predicated region
      $region9: #{tpu_custom_call.1} parent=5 // pred_check
        _
      $region10: #{tpu_custom_call.1} parent=5 // pred_check_branch
        %225 = sbr.rel (%p222) target = $region12
      $region11: #{tpu_custom_call.1} parent=5 // pred_region
        %s226 = ssub.s32 %s24, 1
        // Predicated region
        $region13: #{tpu_custom_call.1} parent=11 // pred_check
          %p227 = pneg %p97
        $region14: #{tpu_custom_call.1} parent=11 // pred_check_branch
          %229 = sbr.rel (%p227) target = $region16
        $region15: #{tpu_custom_call.1} parent=11 // pred_region
          _
        $region16: #{tpu_custom_call.1} parent=11 // pred_fallthru
          _
        // Predicated region
        $region17: #{tpu_custom_call.1} parent=11 // pred_check
          %p230 = pneg %p118
        $region18: #{tpu_custom_call.1} parent=11 // pred_check_branch
          %232 = sbr.rel (%p230) target = $region20
        $region19: #{tpu_custom_call.1} parent=11 // pred_region
          _
        $region20: #{tpu_custom_call.1} parent=11 // pred_fallthru
          _
        // Predicated region
        $region21: #{tpu_custom_call.1} parent=11 // pred_check
          %p233 = pneg %p139
        $region22: #{tpu_custom_call.1} parent=11 // pred_check_branch
          %235 = sbr.rel (%p233) target = $region24
        $region23: #{tpu_custom_call.1} parent=11 // pred_region
          %s237 = ssub.s32 3072, 3072
          %238 = vsyncadd [#allocation6], %s237
          %s239 = sshll.u32 [#allocation5], 4
          %s240 = int_to_ptr.vmem [resolvable:$true] %s239
          %245 = dma.hbm_to_vmem [thread:$0]  %s4, 3072, %s240, [#allocation6], 64, 64, 4
        $region24: #{tpu_custom_call.1} parent=11 // pred_fallthru
          _
        // Predicated region
        $region25: #{tpu_custom_call.1} parent=11 // pred_check
          %p246 = pneg %p160
        $region26: #{tpu_custom_call.1} parent=11 // pred_check_branch
          %248 = sbr.rel (%p246) target = $region28
        $region27: #{tpu_custom_call.1} parent=11 // pred_region
          _
        $region28: #{tpu_custom_call.1} parent=11 // pred_fallthru
          _
      $region12: #{tpu_custom_call.1} parent=5 // pred_fallthru
        _
      %p249 = scmp.lt.s32.totalorder %s24, 2
      // Predicated region
      $region29: #{tpu_custom_call.1} parent=5 // pred_check
        %p250 = pneg %p249
      $region30: #{tpu_custom_call.1} parent=5 // pred_check_branch
        %252 = sbr.rel (%p250) target = $region32
      $region31: #{tpu_custom_call.1} parent=5 // pred_region
        // Predicated region
        $region33: #{tpu_custom_call.1} parent=31 // pred_check
          %p253 = pneg %p44
        $region34: #{tpu_custom_call.1} parent=31 // pred_check_branch
          %255 = sbr.rel (%p253) target = $region36
        $region35: #{tpu_custom_call.1} parent=31 // pred_region
          %s256 = sand.u32 %s34, 1
          %s257 = scalar_lea.sflag [#allocation3], %s256
          %s258 = sand.u32 %s34, 1
          %s259 = smul.addr %s258, 64
          %s260 = scalar_lea.vmem [#allocation2], %s259
          %s261 = smul.u32 16, %s24
          %s263 = ssub.s32 1024, 1024
          %264 = vsyncadd %s257, %s263
          %s265 = smul.addr %s261, 64
          %s266 = scalar_lea.hbm %s0, %s265
          %s267 = sshll.u32 %s260, 4
          %s268 = int_to_ptr.vmem [resolvable:$true] %s267
          %273 = dma.hbm_to_vmem [thread:$0]  %s266, 1024, %s268, %s257, 64, 64, 4
        $region36: #{tpu_custom_call.1} parent=31 // pred_fallthru
          _
        // Predicated region
        $region37: #{tpu_custom_call.1} parent=31 // pred_check
          %p274 = pneg %p70
        $region38: #{tpu_custom_call.1} parent=31 // pred_check_branch
          %276 = sbr.rel (%p274) target = $region40
        $region39: #{tpu_custom_call.1} parent=31 // pred_region
          %s277 = smul.u32 16, %s24
          %p278 = scmp.lt.s32.totalorder %s277, 31
          %s279 = scalar_select %p278, %s277, 31
          %s280 = smul.addr %s279, 8
          %s281 = scalar_lea.vmem %s1, %s280
          %s282 = smul.u32 16, %s24
        $region40: #{tpu_custom_call.1} parent=31 // pred_fallthru
          _
      $region32: #{tpu_custom_call.1} parent=5 // pred_fallthru
        _
      %p283 = scmp.le.s32.totalorder 1, %s24
      %p284 = scmp.lt.s32.totalorder %s24, 3
      %p285 = pnand %p283, %p284
      %p286 = pneg %p285
      // Predicated region
      $region41: #{tpu_custom_call.1} parent=5 // pred_check
        _
      $region42: #{tpu_custom_call.1} parent=5 // pred_check_branch
        %288 = sbr.rel (%p285) target = $region44
      $region43: #{tpu_custom_call.1} parent=5 // pred_region
        %s289 = ssub.s32 %s24, 1
        %s290 = sand.u32 %s37, 1
        %s291 = scalar_lea.sflag [#allocation3], %s290
        %s292 = sand.u32 %s37, 1
        %s293 = smul.addr %s292, 64
        %s294 = scalar_lea.vmem [#allocation2], %s293
        // Predicated region
        $region45: #{tpu_custom_call.1} parent=43 // pred_check
          %p295 = pneg %p50
        $region46: #{tpu_custom_call.1} parent=43 // pred_check_branch
          %297 = sbr.rel (%p295) target = $region48
        $region47: #{tpu_custom_call.1} parent=43 // pred_region
          %298 = dma.done %s291, 1024
        $region48: #{tpu_custom_call.1} parent=43 // pred_fallthru
          _
        // Predicated region
        $region49: #{tpu_custom_call.1} parent=43 // pred_check
          %p299 = pneg %p139
        $region50: #{tpu_custom_call.1} parent=43 // pred_check_branch
          %301 = sbr.rel (%p299) target = $region52
        $region51: #{tpu_custom_call.1} parent=43 // pred_region
          %302 = dma.done [#allocation6], 3072
        $region52: #{tpu_custom_call.1} parent=43 // pred_fallthru
          _
        %s303 = sand.u32 %s37, 1
        %s304 = scalar_lea.sflag [#allocation3], %s303
        %s305 = sand.u32 %s37, 1
        %s306 = smul.addr %s305, 64
        %s307 = scalar_lea.vmem [#allocation2], %s306
        %p308 = pneg %p50
        %p309 = pneg %p47
        %s310 = smul.u32 16, %s29
        %p311 = scmp.lt.s32.totalorder %s310, 31
        %s312 = scalar_select %p311, %s310, 31
        %s313 = smul.addr %s312, 8
        %s314 = scalar_lea.vmem %s1, %s313
        %p315 = pneg %p76
        %p316 = pneg %p73
        %p317 = pneg %p97
        %p318 = pneg %p94
        %p319 = pneg %p118
        %p320 = pneg %p115
        %p321 = pneg %p139
        %p322 = pneg %p136
        %p323 = pneg %p160
        %p324 = pneg %p157
        %p325 = pneg %p186
        %p326 = pneg %p183
        %s327 = sand.u32 %s173, 1
        %s328 = scalar_lea.sflag [#allocation4], %s327
        %s329 = sand.u32 %s173, 1
        %s330 = smul.addr %s329, 8
        %s331 = scalar_lea.vmem [#allocation7], %s330
        %p332 = pneg %p212
        %p333 = pneg %p209
        %s334 = sand.u32 %s199, 1
        %s335 = scalar_lea.sflag [#allocation9], %s334
        %s336 = sand.u32 %s199, 1
        %s337 = smul.addr %s336, 64
        %s338 = scalar_lea.vmem [#allocation8], %s337
        %s339 = smul.u32 16, %s29
        %s340 = smul.u32 16, %s29
        %p341 = scmp.lt.s32.totalorder %s340, 31
        %s342 = scalar_select %p341, %s340, 31
        %s343 = smul.addr %s342, 8
        %s344 = scalar_lea.vmem %s1, %s343
        %s345 = smul.u32 16, %s29
        %s346 = smul.u32 8, %s29
        %s347 = smul.u32 16, %s29
        %v349 = vld [vmem:[%s294] sm:$0xf]
        %v350 = vld [vmem:[%s294 + $0x4] sm:$0xf]
        %v351 = vld [vmem:[%s294 + $0x8] sm:$0xf]
        %v352 = vld [vmem:[%s294 + $0xc] sm:$0xf]
        %v353 = vld [vmem:[%s294 + $0x10] sm:$0xf]
        %v354 = vld [vmem:[%s294 + $0x14] sm:$0xf]
        %v355 = vld [vmem:[%s294 + $0x18] sm:$0xf]
        %v356 = vld [vmem:[%s294 + $0x1c] sm:$0xf]
        %v357 = vld [vmem:[%s294 + $0x20] sm:$0xf]
        %v358 = vld [vmem:[%s294 + $0x24] sm:$0xf]
        %v359 = vld [vmem:[%s294 + $0x28] sm:$0xf]
        %v360 = vld [vmem:[%s294 + $0x2c] sm:$0xf]
        %v361 = vld [vmem:[%s294 + $0x30] sm:$0xf]
        %v362 = vld [vmem:[%s294 + $0x34] sm:$0xf]
        %v363 = vld [vmem:[%s294 + $0x38] sm:$0xf]
        %v364 = vld [vmem:[%s294 + $0x3c] sm:$0xf]
        %v365 = vld [vmem:[%s2] sm:$0xf]
        %v366 = vld [vmem:[%s2 + $0x4] sm:$0xf]
        %v367 = vld [vmem:[%s2 + $0x8] sm:$0xf]
        %v368 = vld [vmem:[%s2 + $0xc] sm:$0xf]
        %v369 = vld [vmem:[%s2 + $0x10] sm:$0xf]
        %v370 = vld [vmem:[%s2 + $0x14] sm:$0xf]
        %v371 = vld [vmem:[%s2 + $0x18] sm:$0xf]
        %v372 = vld [vmem:[%s2 + $0x1c] sm:$0xf]
        %v373 = vld [vmem:[%s2 + $0x20] sm:$0xf]
        %v374 = vld [vmem:[%s2 + $0x24] sm:$0xf]
        %v375 = vld [vmem:[%s2 + $0x28] sm:$0xf]
        %v376 = vld [vmem:[%s2 + $0x2c] sm:$0xf]
        %v377 = vld [vmem:[%s2 + $0x30] sm:$0xf]
        %v378 = vld [vmem:[%s2 + $0x34] sm:$0xf]
        %v379 = vld [vmem:[%s2 + $0x38] sm:$0xf]
        %v380 = vld [vmem:[%s2 + $0x3c] sm:$0xf]
        %v397 = vunpack.c.l.b16 %v349
        %v398 = vunpack.c.l.b16 %v350
        %v399 = vunpack.c.l.b16 %v351
        %v400 = vunpack.c.l.b16 %v352
        %v401 = vunpack.c.l.b16 %v353
        %v402 = vunpack.c.l.b16 %v354
        %v403 = vunpack.c.l.b16 %v355
        %v404 = vunpack.c.l.b16 %v356
        %v405 = vunpack.c.l.b16 %v357
        %v406 = vunpack.c.l.b16 %v358
        %v407 = vunpack.c.l.b16 %v359
        %v408 = vunpack.c.l.b16 %v360
        %v409 = vunpack.c.l.b16 %v361
        %v410 = vunpack.c.l.b16 %v362
        %v411 = vunpack.c.l.b16 %v363
        %v412 = vunpack.c.l.b16 %v364
        %v413 = vpack.c.b16 %v398, %v397
        %v414 = vpack.c.b16 %v400, %v399
        %v415 = vpack.c.b16 %v402, %v401
        %v416 = vpack.c.b16 %v404, %v403
        %v417 = vpack.c.b16 %v406, %v405
        %v418 = vpack.c.b16 %v408, %v407
        %v419 = vpack.c.b16 %v410, %v409
        %v420 = vpack.c.b16 %v412, %v411
        %vm421 = vsmask.f32 7424
        %v423 = vshrl.u32 %v413, 16
        %v425 = vshll.u32 %v413, 16
        %v427 = vrot.slane %v425, 1
        %v428 = vor.u32 %v423, %v427
        %v430 = vshll.u32 %v414, 16
        %v432 = vrot.slane %v430, 1
        %v433 = vsel %vm421, %v428, %v432
        %v434 = vshrl.u32 %v414, 16
        %v436 = vor.u32 %v434, %v432
        %v438 = vshll.u32 %v415, 16
        %v440 = vrot.slane %v438, 1
        %v441 = vsel %vm421, %v436, %v440
        %v442 = vshrl.u32 %v415, 16
        %v444 = vor.u32 %v442, %v440
        %v446 = vshll.u32 %v416, 16
        %v448 = vrot.slane %v446, 1
        %v449 = vsel %vm421, %v444, %v448
        %v450 = vshrl.u32 %v416, 16
        %v452 = vor.u32 %v450, %v448
        %v454 = vshll.u32 %v417, 16
        %v456 = vrot.slane %v454, 1
        %v457 = vsel %vm421, %v452, %v456
        %v458 = vshrl.u32 %v417, 16
        %v460 = vor.u32 %v458, %v456
        %v462 = vshll.u32 %v418, 16
        %v464 = vrot.slane %v462, 1
        %v465 = vsel %vm421, %v460, %v464
        %v466 = vshrl.u32 %v418, 16
        %v468 = vor.u32 %v466, %v464
        %v470 = vshll.u32 %v419, 16
        %v472 = vrot.slane %v470, 1
        %v473 = vsel %vm421, %v468, %v472
        %v474 = vshrl.u32 %v419, 16
        %v476 = vor.u32 %v474, %v472
        %v478 = vshll.u32 %v420, 16
        %v480 = vrot.slane %v478, 1
        %v481 = vsel %vm421, %v476, %v480
        %v482 = vshrl.u32 %v420, 16
        %v484 = vor.u32 %v482, %v480
        %v493 = vpack.c.b16 %v397, %v397
        %v495 = vshll.u32 %v493, 16
        %v497 = vrot.slane %v495, 1
        %vm499 = vcmask 1047552
        %vm500 = vmand %vm499, %vm421
        %v501 = vsel %vm500, %v484, %v497
        %s502 = scalar_lea.vmem %s2, 64
        %v503 = vld [vmem:[%s502] sm:$0xf]
        %v504 = vld [vmem:[%s502 + $0x4] sm:$0xf]
        %v505 = vld [vmem:[%s502 + $0x8] sm:$0xf]
        %v506 = vld [vmem:[%s502 + $0xc] sm:$0xf]
        %v507 = vld [vmem:[%s502 + $0x10] sm:$0xf]
        %v508 = vld [vmem:[%s502 + $0x14] sm:$0xf]
        %v509 = vld [vmem:[%s502 + $0x18] sm:$0xf]
        %v510 = vld [vmem:[%s502 + $0x1c] sm:$0xf]
        %v511 = vld [vmem:[%s502 + $0x20] sm:$0xf]
        %v512 = vld [vmem:[%s502 + $0x24] sm:$0xf]
        %v513 = vld [vmem:[%s502 + $0x28] sm:$0xf]
        %v514 = vld [vmem:[%s502 + $0x2c] sm:$0xf]
        %v515 = vld [vmem:[%s502 + $0x30] sm:$0xf]
        %v516 = vld [vmem:[%s502 + $0x34] sm:$0xf]
        %v517 = vld [vmem:[%s502 + $0x38] sm:$0xf]
        %v518 = vld [vmem:[%s502 + $0x3c] sm:$0xf]
        %v535 = vunpack.c.l.b16 %v503
        %v536 = vunpack.c.l.b16 %v504
        %v537 = vunpack.c.l.b16 %v505
        %v538 = vunpack.c.l.b16 %v506
        %v539 = vunpack.c.l.b16 %v507
        %v540 = vunpack.c.l.b16 %v508
        %v541 = vunpack.c.l.b16 %v509
        %v542 = vunpack.c.l.b16 %v510
        %v543 = vunpack.c.l.b16 %v511
        %v544 = vunpack.c.l.b16 %v512
        %v545 = vunpack.c.l.b16 %v513
        %v546 = vunpack.c.l.b16 %v514
        %v547 = vunpack.c.l.b16 %v515
        %v548 = vunpack.c.l.b16 %v516
        %v549 = vunpack.c.l.b16 %v517
        %v550 = vunpack.c.l.b16 %v518
        %v551 = vpack.c.b16 %v536, %v535
        %v552 = vpack.c.b16 %v538, %v537
        %v553 = vpack.c.b16 %v540, %v539
        %v554 = vpack.c.b16 %v542, %v541
        %v555 = vpack.c.b16 %v544, %v543
        %v556 = vpack.c.b16 %v546, %v545
        %v557 = vpack.c.b16 %v548, %v547
        %v558 = vpack.c.b16 %v550, %v549
        %567 = vmatprep.subr.bf16.mxu0 0
        %568 = vmatpush1.bf16.msra.mxu0 %v551
        %569 = vmatprep.subr.bf16.mxu0 0
        %570 = vmatpush1.bf16.msra.mxu0 %v552
        %571 = vmatprep.subr.bf16.mxu0 0
        %572 = vmatpush1.bf16.msra.mxu0 %v553
        %573 = vmatprep.subr.bf16.mxu0 0
        %574 = vmatpush1.bf16.msra.mxu0 %v554
        %575 = vmatprep.subr.bf16.mxu0 0
        %576 = vmatpush1.bf16.msra.mxu0 %v555
        %577 = vmatprep.subr.bf16.mxu0 0
        %578 = vmatpush1.bf16.msra.mxu0 %v556
        %579 = vmatprep.subr.bf16.mxu0 0
        %580 = vmatpush1.bf16.msra.mxu0 %v557
        %581 = vmatprep.subr.bf16.mxu0 0
        %582 = vmatpush1.bf16.msra.mxu0 %v558
        %583 = vmatprep.subr.bf16.mxu0 0
        %584 = vmatpush1.bf16.msra.mxu0 0
        %585 = vmatprep.subr.bf16.mxu0 0
        %586 = vmatpush1.bf16.msra.mxu0 0
        %587 = vmatprep.subr.bf16.mxu0 0
        %588 = vmatpush1.bf16.msra.mxu0 0
        %589 = vmatprep.subr.bf16.mxu0 0
        %590 = vmatpush1.bf16.msra.mxu0 0
        %591 = vmatprep.subr.bf16.mxu0 0
        %592 = vmatpush1.bf16.msra.mxu0 0
        %593 = vmatprep.subr.bf16.mxu0 0
        %594 = vmatpush1.bf16.msra.mxu0 0
        %595 = vmatprep.subr.bf16.mxu0 0
        %596 = vmatpush1.bf16.msra.mxu0 0
        %597 = vmatprep.subr.bf16.mxu0 0
        %598 = vmatpush1.bf16.msra.mxu0 0
        %599 = vmatprep.mubr.bf16.mxu0 0
        %600 = vmatmul.mubr.bf16.gmra.mrb[0].mxu0 %v433
        %v601 = vpop.f32.mrb[0].mxu0
        %v602 = vadd.f32 0.0, %v601
        %v603 = vpop.f32.mrb[0].mxu0
        %v604 = vpop.f32.mrb[0].mxu0
        %v605 = vadd.f32 0.0, %v604
        %v606 = vpop.f32.mrb[0].mxu0
        %607 = vmatprep.mubr.bf16.mxu0 0
        %608 = vmatmul.mubr.bf16.gmra.mrb[0].mxu0 %v441
        %v609 = vpop.f32.mrb[0].mxu0
        %v610 = vadd.f32 0.0, %v609
        %v611 = vpop.f32.mrb[0].mxu0
        %v612 = vpop.f32.mrb[0].mxu0
        %v613 = vadd.f32 0.0, %v612
        %v614 = vpop.f32.mrb[0].mxu0
        %615 = vmatprep.mubr.bf16.mxu0 0
        %616 = vmatmul.mubr.bf16.gmra.mrb[0].mxu0 %v449
        %v617 = vpop.f32.mrb[0].mxu0
        %v618 = vadd.f32 0.0, %v617
        %v619 = vpop.f32.mrb[0].mxu0
        %v620 = vpop.f32.mrb[0].mxu0
        %v621 = vadd.f32 0.0, %v620
        %v622 = vpop.f32.mrb[0].mxu0
        %623 = vmatprep.mubr.bf16.mxu0 0
        %624 = vmatmul.mubr.bf16.gmra.mrb[0].mxu0 %v457
        %v625 = vpop.f32.mrb[0].mxu0
        %v626 = vadd.f32 0.0, %v625
        %v627 = vpop.f32.mrb[0].mxu0
        %v628 = vpop.f32.mrb[0].mxu0
        %v629 = vadd.f32 0.0, %v628
        %v630 = vpop.f32.mrb[0].mxu0
        %631 = vmatprep.mubr.bf16.mxu0 0
        %632 = vmatmul.mubr.bf16.gmra.mrb[0].mxu0 %v465
        %v633 = vpop.f32.mrb[0].mxu0
        %v634 = vadd.f32 0.0, %v633
        %v635 = vpop.f32.mrb[0].mxu0
        %v636 = vpop.f32.mrb[0].mxu0
        %v637 = vadd.f32 0.0, %v636
        %v638 = vpop.f32.mrb[0].mxu0
        %639 = vmatprep.mubr.bf16.mxu0 0
        %640 = vmatmul.mubr.bf16.gmra.mrb[0].mxu0 %v473
        %v641 = vpop.f32.mrb[0].mxu0
        %v642 = vadd.f32 0.0, %v641
        %v643 = vpop.f32.mrb[0].mxu0
        %v644 = vpop.f32.mrb[0].mxu0
        %v645 = vadd.f32 0.0, %v644
        %v646 = vpop.f32.mrb[0].mxu0
        %647 = vmatprep.mubr.bf16.mxu0 0
        %648 = vmatmul.mubr.bf16.gmra.mrb[0].mxu0 %v481
        %v649 = vpop.f32.mrb[0].mxu0
        %v650 = vadd.f32 0.0, %v649
        %v651 = vpop.f32.mrb[0].mxu0
        %v652 = vpop.f32.mrb[0].mxu0
        %v653 = vadd.f32 0.0, %v652
        %v654 = vpop.f32.mrb[0].mxu0
        %655 = vmatprep.mubr.bf16.mxu0 0
        %656 = vmatmul.mubr.bf16.gmra.mrb[0].mxu0 %v501
        %v657 = vpop.f32.mrb[0].mxu0
        %v658 = vadd.f32 0.0, %v657
        %v659 = vpop.f32.mrb[0].mxu0
        %v660 = vpop.f32.mrb[0].mxu0
        %v661 = vadd.f32 0.0, %v660
        %v662 = vpop.f32.mrb[0].mxu0
        %663 = vdwg.mxu0
        %v688 = vunpack.c.l.b16 %v365
        %v689 = vunpack.c.l.b16 %v366
        %v690 = vunpack.c.l.b16 %v367
        %v691 = vunpack.c.l.b16 %v368
        %v692 = vunpack.c.l.b16 %v369
        %v693 = vunpack.c.l.b16 %v370
        %v694 = vunpack.c.l.b16 %v371
        %v695 = vunpack.c.l.b16 %v372
        %v696 = vunpack.c.l.b16 %v373
        %v697 = vunpack.c.l.b16 %v374
        %v698 = vunpack.c.l.b16 %v375
        %v699 = vunpack.c.l.b16 %v376
        %v700 = vunpack.c.l.b16 %v377
        %v701 = vunpack.c.l.b16 %v378
        %v702 = vunpack.c.l.b16 %v379
        %v703 = vunpack.c.l.b16 %v380
        %v704 = vpack.c.b16 %v689, %v688
        %v705 = vpack.c.b16 %v691, %v690
        %v706 = vpack.c.b16 %v693, %v692
        %v707 = vpack.c.b16 %v695, %v694
        %v708 = vpack.c.b16 %v697, %v696
        %v709 = vpack.c.b16 %v699, %v698
        %v710 = vpack.c.b16 %v701, %v700
        %v711 = vpack.c.b16 %v703, %v702
        %720 = vmatprep.subr.bf16.mxu0 0
        %721 = vmatpush1.bf16.msra.mxu0 %v704
        %722 = vmatprep.subr.bf16.mxu0 0
        %723 = vmatpush1.bf16.msra.mxu0 %v705
        %724 = vmatprep.subr.bf16.mxu0 0
        %725 = vmatpush1.bf16.msra.mxu0 %v706
        %726 = vmatprep.subr.bf16.mxu0 0
        %727 = vmatpush1.bf16.msra.mxu0 %v707
        %728 = vmatprep.subr.bf16.mxu0 0
        %729 = vmatpush1.bf16.msra.mxu0 %v708
        %730 = vmatprep.subr.bf16.mxu0 0
        %731 = vmatpush1.bf16.msra.mxu0 %v709
        %732 = vmatprep.subr.bf16.mxu0 0
        %733 = vmatpush1.bf16.msra.mxu0 %v710
        %734 = vmatprep.subr.bf16.mxu0 0
        %735 = vmatpush1.bf16.msra.mxu0 %v711
        %736 = vmatprep.subr.bf16.mxu0 0
        %737 = vmatpush1.bf16.msra.mxu0 0
        %738 = vmatprep.subr.bf16.mxu0 0
        %739 = vmatpush1.bf16.msra.mxu0 0
        %740 = vmatprep.subr.bf16.mxu0 0
        %741 = vmatpush1.bf16.msra.mxu0 0
        %742 = vmatprep.subr.bf16.mxu0 0
        %743 = vmatpush1.bf16.msra.mxu0 0
        %744 = vmatprep.subr.bf16.mxu0 0
        %745 = vmatpush1.bf16.msra.mxu0 0
        %746 = vmatprep.subr.bf16.mxu0 0
        %747 = vmatpush1.bf16.msra.mxu0 0
        %748 = vmatprep.subr.bf16.mxu0 0
        %749 = vmatpush1.bf16.msra.mxu0 0
        %750 = vmatprep.subr.bf16.mxu0 0
        %751 = vmatpush1.bf16.msra.mxu0 0
        %752 = vmatprep.mubr.bf16.mxu0 0
        %753 = vmatmul.mubr.bf16.gmra.mrb[0].mxu0 %v413
        %v754 = vpop.f32.mrb[0].mxu0
        %v755 = vadd.f32 %v602, %v754
        %v756 = vpop.f32.mrb[0].mxu0
        %v757 = vpop.f32.mrb[0].mxu0
        %v758 = vadd.f32 %v605, %v757
        %v759 = vpop.f32.mrb[0].mxu0
        %760 = vmatprep.mubr.bf16.mxu0 0
        %761 = vmatmul.mubr.bf16.gmra.mrb[0].mxu0 %v414
        %v762 = vpop.f32.mrb[0].mxu0
        %v763 = vadd.f32 %v610, %v762
        %v764 = vpop.f32.mrb[0].mxu0
        %v765 = vpop.f32.mrb[0].mxu0
        %v766 = vadd.f32 %v613, %v765
        %v767 = vpop.f32.mrb[0].mxu0
        %768 = vmatprep.mubr.bf16.mxu0 0
        %769 = vmatmul.mubr.bf16.gmra.mrb[0].mxu0 %v415
        %v770 = vpop.f32.mrb[0].mxu0
        %v771 = vadd.f32 %v618, %v770
        %v772 = vpop.f32.mrb[0].mxu0
        %v773 = vpop.f32.mrb[0].mxu0
        %v774 = vadd.f32 %v621, %v773
        %v775 = vpop.f32.mrb[0].mxu0
        %776 = vmatprep.mubr.bf16.mxu0 0
        %777 = vmatmul.mubr.bf16.gmra.mrb[0].mxu0 %v416
        %v778 = vpop.f32.mrb[0].mxu0
        %v779 = vadd.f32 %v626, %v778
        %v780 = vpop.f32.mrb[0].mxu0
        %v781 = vpop.f32.mrb[0].mxu0
        %v782 = vadd.f32 %v629, %v781
        %v783 = vpop.f32.mrb[0].mxu0
        %784 = vmatprep.mubr.bf16.mxu0 0
        %785 = vmatmul.mubr.bf16.gmra.mrb[0].mxu0 %v417
        %v786 = vpop.f32.mrb[0].mxu0
        %v787 = vadd.f32 %v634, %v786
        %v788 = vpop.f32.mrb[0].mxu0
        %v789 = vpop.f32.mrb[0].mxu0
        %v790 = vadd.f32 %v637, %v789
        %v791 = vpop.f32.mrb[0].mxu0
        %792 = vmatprep.mubr.bf16.mxu0 0
        %793 = vmatmul.mubr.bf16.gmra.mrb[0].mxu0 %v418
        %v794 = vpop.f32.mrb[0].mxu0
        %v795 = vadd.f32 %v642, %v794
        %v796 = vpop.f32.mrb[0].mxu0
        %v797 = vpop.f32.mrb[0].mxu0
        %v798 = vadd.f32 %v645, %v797
        %v799 = vpop.f32.mrb[0].mxu0
        %800 = vmatprep.mubr.bf16.mxu0 0
        %801 = vmatmul.mubr.bf16.gmra.mrb[0].mxu0 %v419
        %v802 = vpop.f32.mrb[0].mxu0
        %v803 = vadd.f32 %v650, %v802
        %v804 = vpop.f32.mrb[0].mxu0
        %v805 = vpop.f32.mrb[0].mxu0
        %v806 = vadd.f32 %v653, %v805
        %v807 = vpop.f32.mrb[0].mxu0
        %808 = vmatprep.mubr.bf16.mxu0 0
        %809 = vmatmul.mubr.bf16.gmra.mrb[0].mxu0 %v420
        %v810 = vpop.f32.mrb[0].mxu0
        %v811 = vadd.f32 %v658, %v810
        %v812 = vpop.f32.mrb[0].mxu0
        %v813 = vpop.f32.mrb[0].mxu0
        %v814 = vadd.f32 %v661, %v813
        %v815 = vpop.f32.mrb[0].mxu0
        %816 = vdwg.mxu0
        %vm817 = vcmask 1046528
        %v818 = vrot.slane %v413, 1
        %v819 = vrot.slane %v414, 1
        %v820 = vsel %vm817, %v818, %v819
        %v821 = vrot.slane %v415, 1
        %v822 = vsel %vm817, %v819, %v821
        %v823 = vrot.slane %v416, 1
        %v824 = vsel %vm817, %v821, %v823
        %v825 = vrot.slane %v417, 1
        %v826 = vsel %vm817, %v823, %v825
        %v827 = vrot.slane %v418, 1
        %v828 = vsel %vm817, %v825, %v827
        %v829 = vrot.slane %v419, 1
        %v830 = vsel %vm817, %v827, %v829
        %v831 = vrot.slane %v420, 1
        %v832 = vsel %vm817, %v829, %v831
        %v840 = vrot.slane %v493, 1
        %vm841 = vcmask 1046528
        %v844 = vsel %vm841, %v831, %v840
        %s846 = scalar_lea.vmem %s2, 128
        %v847 = vld [vmem:[%s846] sm:$0xf]
        %v848 = vld [vmem:[%s846 + $0x4] sm:$0xf]
        %v849 = vld [vmem:[%s846 + $0x8] sm:$0xf]
        %v850 = vld [vmem:[%s846 + $0xc] sm:$0xf]
        %v851 = vld [vmem:[%s846 + $0x10] sm:$0xf]
        %v852 = vld [vmem:[%s846 + $0x14] sm:$0xf]
        %v853 = vld [vmem:[%s846 + $0x18] sm:$0xf]
        %v854 = vld [vmem:[%s846 + $0x1c] sm:$0xf]
        %v855 = vld [vmem:[%s846 + $0x20] sm:$0xf]
        %v856 = vld [vmem:[%s846 + $0x24] sm:$0xf]
        %v857 = vld [vmem:[%s846 + $0x28] sm:$0xf]
        %v858 = vld [vmem:[%s846 + $0x2c] sm:$0xf]
        %v859 = vld [vmem:[%s846 + $0x30] sm:$0xf]
        %v860 = vld [vmem:[%s846 + $0x34] sm:$0xf]
        %v861 = vld [vmem:[%s846 + $0x38] sm:$0xf]
        %v862 = vld [vmem:[%s846 + $0x3c] sm:$0xf]
        %v879 = vunpack.c.l.b16 %v847
        %v880 = vunpack.c.l.b16 %v848
        %v881 = vunpack.c.l.b16 %v849
        %v882 = vunpack.c.l.b16 %v850
        %v883 = vunpack.c.l.b16 %v851
        %v884 = vunpack.c.l.b16 %v852
        %v885 = vunpack.c.l.b16 %v853
        %v886 = vunpack.c.l.b16 %v854
        %v887 = vunpack.c.l.b16 %v855
        %v888 = vunpack.c.l.b16 %v856
        %v889 = vunpack.c.l.b16 %v857
        %v890 = vunpack.c.l.b16 %v858
        %v891 = vunpack.c.l.b16 %v859
        %v892 = vunpack.c.l.b16 %v860
        %v893 = vunpack.c.l.b16 %v861
        %v894 = vunpack.c.l.b16 %v862
        %v895 = vpack.c.b16 %v880, %v879
        %v896 = vpack.c.b16 %v882, %v881
        %v897 = vpack.c.b16 %v884, %v883
        %v898 = vpack.c.b16 %v886, %v885
        %v899 = vpack.c.b16 %v888, %v887
        %v900 = vpack.c.b16 %v890, %v889
        %v901 = vpack.c.b16 %v892, %v891
        %v902 = vpack.c.b16 %v894, %v893
        %911 = vmatprep.subr.bf16.mxu0 0
        %912 = vmatpush1.bf16.msra.mxu0 %v895
        %913 = vmatprep.subr.bf16.mxu0 0
        %914 = vmatpush1.bf16.msra.mxu0 %v896
        %915 = vmatprep.subr.bf16.mxu0 0
        %916 = vmatpush1.bf16.msra.mxu0 %v897
        %917 = vmatprep.subr.bf16.mxu0 0
        %918 = vmatpush1.bf16.msra.mxu0 %v898
        %919 = vmatprep.subr.bf16.mxu0 0
        %920 = vmatpush1.bf16.msra.mxu0 %v899
        %921 = vmatprep.subr.bf16.mxu0 0
        %922 = vmatpush1.bf16.msra.mxu0 %v900
        %923 = vmatprep.subr.bf16.mxu0 0
        %924 = vmatpush1.bf16.msra.mxu0 %v901
        %925 = vmatprep.subr.bf16.mxu0 0
        %926 = vmatpush1.bf16.msra.mxu0 %v902
        %927 = vmatprep.subr.bf16.mxu0 0
        %928 = vmatpush1.bf16.msra.mxu0 0
        %929 = vmatprep.subr.bf16.mxu0 0
        %930 = vmatpush1.bf16.msra.mxu0 0
        %931 = vmatprep.subr.bf16.mxu0 0
        %932 = vmatpush1.bf16.msra.mxu0 0
        %933 = vmatprep.subr.bf16.mxu0 0
        %934 = vmatpush1.bf16.msra.mxu0 0
        %935 = vmatprep.subr.bf16.mxu0 0
        %936 = vmatpush1.bf16.msra.mxu0 0
        %937 = vmatprep.subr.bf16.mxu0 0
        %938 = vmatpush1.bf16.msra.mxu0 0
        %939 = vmatprep.subr.bf16.mxu0 0
        %940 = vmatpush1.bf16.msra.mxu0 0
        %941 = vmatprep.subr.bf16.mxu0 0
        %942 = vmatpush1.bf16.msra.mxu0 0
        %943 = vmatprep.mubr.bf16.mxu0 0
        %944 = vmatmul.mubr.bf16.gmra.mrb[0].mxu0 %v820
        %v945 = vpop.f32.mrb[0].mxu0
        %v946 = vadd.f32 0.0, %v945
        %v947 = vpop.f32.mrb[0].mxu0
        %v948 = vpop.f32.mrb[0].mxu0
        %v949 = vadd.f32 0.0, %v948
        %v950 = vpop.f32.mrb[0].mxu0
        %951 = vmatprep.mubr.bf16.mxu0 0
        %952 = vmatmul.mubr.bf16.gmra.mrb[0].mxu0 %v822
        %v953 = vpop.f32.mrb[0].mxu0
        %v954 = vadd.f32 0.0, %v953
        %v955 = vpop.f32.mrb[0].mxu0
        %v956 = vpop.f32.mrb[0].mxu0
        %v957 = vadd.f32 0.0, %v956
        %v958 = vpop.f32.mrb[0].mxu0
        %959 = vmatprep.mubr.bf16.mxu0 0
        %960 = vmatmul.mubr.bf16.gmra.mrb[0].mxu0 %v824
        %v961 = vpop.f32.mrb[0].mxu0
        %v962 = vadd.f32 0.0, %v961
        %v963 = vpop.f32.mrb[0].mxu0
        %v964 = vpop.f32.mrb[0].mxu0
        %v965 = vadd.f32 0.0, %v964
        %v966 = vpop.f32.mrb[0].mxu0
        %967 = vmatprep.mubr.bf16.mxu0 0
        %968 = vmatmul.mubr.bf16.gmra.mrb[0].mxu0 %v826
        %v969 = vpop.f32.mrb[0].mxu0
        %v970 = vadd.f32 0.0, %v969
        %v971 = vpop.f32.mrb[0].mxu0
        %v972 = vpop.f32.mrb[0].mxu0
        %v973 = vadd.f32 0.0, %v972
        %v974 = vpop.f32.mrb[0].mxu0
        %975 = vmatprep.mubr.bf16.mxu0 0
        %976 = vmatmul.mubr.bf16.gmra.mrb[0].mxu0 %v828
        %v977 = vpop.f32.mrb[0].mxu0
        %v978 = vadd.f32 0.0, %v977
        %v979 = vpop.f32.mrb[0].mxu0
        %v980 = vpop.f32.mrb[0].mxu0
        %v981 = vadd.f32 0.0, %v980
        %v982 = vpop.f32.mrb[0].mxu0
        %983 = vmatprep.mubr.bf16.mxu0 0
        %984 = vmatmul.mubr.bf16.gmra.mrb[0].mxu0 %v830
        %v985 = vpop.f32.mrb[0].mxu0
        %v986 = vadd.f32 0.0, %v985
        %v987 = vpop.f32.mrb[0].mxu0
        %v988 = vpop.f32.mrb[0].mxu0
        %v989 = vadd.f32 0.0, %v988
        %v990 = vpop.f32.mrb[0].mxu0
        %991 = vmatprep.mubr.bf16.mxu0 0
        %992 = vmatmul.mubr.bf16.gmra.mrb[0].mxu0 %v832
        %v993 = vpop.f32.mrb[0].mxu0
        %v994 = vadd.f32 0.0, %v993
        %v995 = vpop.f32.mrb[0].mxu0
        %v996 = vpop.f32.mrb[0].mxu0
        %v997 = vadd.f32 0.0, %v996
        %v998 = vpop.f32.mrb[0].mxu0
        %999 = vmatprep.mubr.bf16.mxu0 0
        %1000 = vmatmul.mubr.bf16.gmra.mrb[0].mxu0 %v844
        %v1001 = vpop.f32.mrb[0].mxu0
        %v1002 = vadd.f32 0.0, %v1001
        %v1003 = vpop.f32.mrb[0].mxu0
        %v1004 = vpop.f32.mrb[0].mxu0
        %v1005 = vadd.f32 0.0, %v1004
        %v1006 = vpop.f32.mrb[0].mxu0
        %1007 = vdwg.mxu0
        %v1008 = vadd.f32 %v755, %v946
        %v1009 = vadd.f32 %v758, %v949
        %v1010 = vadd.f32 %v763, %v954
        %v1011 = vadd.f32 %v766, %v957
        %v1012 = vadd.f32 %v771, %v962
        %v1013 = vadd.f32 %v774, %v965
        %v1014 = vadd.f32 %v779, %v970
        %v1015 = vadd.f32 %v782, %v973
        %v1016 = vadd.f32 %v787, %v978
        %v1017 = vadd.f32 %v790, %v981
        %v1018 = vadd.f32 %v795, %v986
        %v1019 = vadd.f32 %v798, %v989
        %v1020 = vadd.f32 %v803, %v994
        %v1021 = vadd.f32 %v806, %v997
        %v1022 = vadd.f32 %v811, %v1002
        %v1023 = vadd.f32 %v814, %v1005
        %v1024 = vld [vmem:[%s3] sm:$0x1]
        %v1026 = vlaneseq
        %v1027 = vshrl.u32 %v1026, 7
        %v1028 = vsub.s32 0, %v1027
        %v1029 = vrot.slane %v1024, %v1028
        %v1031 = vadd.f32 %v1008, %v1029
        %v1032 = vadd.f32 %v1009, %v1029
        %v1033 = vadd.f32 %v1010, %v1029
        %v1034 = vadd.f32 %v1011, %v1029
        %v1035 = vadd.f32 %v1012, %v1029
        %v1036 = vadd.f32 %v1013, %v1029
        %v1037 = vadd.f32 %v1014, %v1029
        %v1038 = vadd.f32 %v1015, %v1029
        %v1039 = vadd.f32 %v1016, %v1029
        %v1040 = vadd.f32 %v1017, %v1029
        %v1041 = vadd.f32 %v1018, %v1029
        %v1042 = vadd.f32 %v1019, %v1029
        %v1043 = vadd.f32 %v1020, %v1029
        %v1044 = vadd.f32 %v1021, %v1029
        %v1045 = vadd.f32 %v1022, %v1029
        %v1046 = vadd.f32 %v1023, %v1029
        %v1047 = vmax.f32 %v1031, 0.0
        %v1048 = vmax.f32 %v1032, 0.0
        %v1049 = vmax.f32 %v1033, 0.0
        %v1050 = vmax.f32 %v1034, 0.0
        %v1051 = vmax.f32 %v1035, 0.0
        %v1052 = vmax.f32 %v1036, 0.0
        %v1053 = vmax.f32 %v1037, 0.0
        %v1054 = vmax.f32 %v1038, 0.0
        %v1055 = vmax.f32 %v1039, 0.0
        %v1056 = vmax.f32 %v1040, 0.0
        %v1057 = vmax.f32 %v1041, 0.0
        %v1058 = vmax.f32 %v1042, 0.0
        %v1059 = vmax.f32 %v1043, 0.0
        %v1060 = vmax.f32 %v1044, 0.0
        %v1061 = vmax.f32 %v1045, 0.0
        %v1062 = vmax.f32 %v1046, 0.0
        %v1063 = vpack.c.bf16 %v1048, %v1047
        %v1064 = vpack.c.bf16 %v1050, %v1049
        %v1065 = vpack.c.bf16 %v1052, %v1051
        %v1066 = vpack.c.bf16 %v1054, %v1053
        %v1067 = vpack.c.bf16 %v1056, %v1055
        %v1068 = vpack.c.bf16 %v1058, %v1057
        %v1069 = vpack.c.bf16 %v1060, %v1059
        %v1070 = vpack.c.bf16 %v1062, %v1061
        %v1071 = vld [vmem:[#allocation5] sm:$0xf]
        %v1072 = vld [vmem:[#allocation5 + $0x4] sm:$0xf]
        %v1073 = vld [vmem:[#allocation5 + $0x8] sm:$0xf]
        %v1074 = vld [vmem:[#allocation5 + $0xc] sm:$0xf]
        %v1075 = vld [vmem:[#allocation5 + $0x10] sm:$0xf]
        %v1076 = vld [vmem:[#allocation5 + $0x14] sm:$0xf]
        %v1077 = vld [vmem:[#allocation5 + $0x18] sm:$0xf]
        %v1078 = vld [vmem:[#allocation5 + $0x1c] sm:$0xf]
        %v1079 = vld [vmem:[#allocation5 + $0x20] sm:$0xf]
        %v1080 = vld [vmem:[#allocation5 + $0x24] sm:$0xf]
        %v1081 = vld [vmem:[#allocation5 + $0x28] sm:$0xf]
        %v1082 = vld [vmem:[#allocation5 + $0x2c] sm:$0xf]
        %v1083 = vld [vmem:[#allocation5 + $0x30] sm:$0xf]
        %v1084 = vld [vmem:[#allocation5 + $0x34] sm:$0xf]
        %v1085 = vld [vmem:[#allocation5 + $0x38] sm:$0xf]
        %v1086 = vld [vmem:[#allocation5 + $0x3c] sm:$0xf]
        %v1088 = vshrl.u32 %v1063, 16
        %v1090 = vshll.u32 %v1063, 16
        %v1092 = vrot.slane %v1090, 1
        %v1093 = vor.u32 %v1088, %v1092
        %v1095 = vshll.u32 %v1064, 16
        %v1097 = vrot.slane %v1095, 1
        %v1098 = vsel %vm421, %v1093, %v1097
        %v1099 = vshrl.u32 %v1064, 16
        %v1101 = vor.u32 %v1099, %v1097
        %v1103 = vshll.u32 %v1065, 16
        %v1105 = vrot.slane %v1103, 1
        %v1106 = vsel %vm421, %v1101, %v1105
        %v1107 = vshrl.u32 %v1065, 16
        %v1109 = vor.u32 %v1107, %v1105
        %v1111 = vshll.u32 %v1066, 16
        %v1113 = vrot.slane %v1111, 1
        %v1114 = vsel %vm421, %v1109, %v1113
        %v1115 = vshrl.u32 %v1066, 16
        %v1117 = vor.u32 %v1115, %v1113
        %v1119 = vshll.u32 %v1067, 16
        %v1121 = vrot.slane %v1119, 1
        %v1122 = vsel %vm421, %v1117, %v1121
        %v1123 = vshrl.u32 %v1067, 16
        %v1125 = vor.u32 %v1123, %v1121
        %v1127 = vshll.u32 %v1068, 16
        %v1129 = vrot.slane %v1127, 1
        %v1130 = vsel %vm421, %v1125, %v1129
        %v1131 = vshrl.u32 %v1068, 16
        %v1133 = vor.u32 %v1131, %v1129
        %v1135 = vshll.u32 %v1069, 16
        %v1137 = vrot.slane %v1135, 1
        %v1138 = vsel %vm421, %v1133, %v1137
        %v1139 = vshrl.u32 %v1069, 16
        %v1141 = vor.u32 %v1139, %v1137
        %v1143 = vshll.u32 %v1070, 16
        %v1145 = vrot.slane %v1143, 1
        %v1146 = vsel %vm421, %v1141, %v1145
        %v1147 = vshrl.u32 %v1070, 16
        %v1149 = vor.u32 %v1147, %v1145
        %v1159 = vsel %vm500, %v1149, %v1092
        %s1160 = scalar_lea.vmem [#allocation5], 64
        %v1161 = vld [vmem:[%s1160] sm:$0xf]
        %v1162 = vld [vmem:[%s1160 + $0x4] sm:$0xf]
        %v1163 = vld [vmem:[%s1160 + $0x8] sm:$0xf]
        %v1164 = vld [vmem:[%s1160 + $0xc] sm:$0xf]
        %v1165 = vld [vmem:[%s1160 + $0x10] sm:$0xf]
        %v1166 = vld [vmem:[%s1160 + $0x14] sm:$0xf]
        %v1167 = vld [vmem:[%s1160 + $0x18] sm:$0xf]
        %v1168 = vld [vmem:[%s1160 + $0x1c] sm:$0xf]
        %v1169 = vld [vmem:[%s1160 + $0x20] sm:$0xf]
        %v1170 = vld [vmem:[%s1160 + $0x24] sm:$0xf]
        %v1171 = vld [vmem:[%s1160 + $0x28] sm:$0xf]
        %v1172 = vld [vmem:[%s1160 + $0x2c] sm:$0xf]
        %v1173 = vld [vmem:[%s1160 + $0x30] sm:$0xf]
        %v1174 = vld [vmem:[%s1160 + $0x34] sm:$0xf]
        %v1175 = vld [vmem:[%s1160 + $0x38] sm:$0xf]
        %v1176 = vld [vmem:[%s1160 + $0x3c] sm:$0xf]
        %v1193 = vunpack.c.l.b16 %v1161
        %v1194 = vunpack.c.l.b16 %v1162
        %v1195 = vunpack.c.l.b16 %v1163
        %v1196 = vunpack.c.l.b16 %v1164
        %v1197 = vunpack.c.l.b16 %v1165
        %v1198 = vunpack.c.l.b16 %v1166
        %v1199 = vunpack.c.l.b16 %v1167
        %v1200 = vunpack.c.l.b16 %v1168
        %v1201 = vunpack.c.l.b16 %v1169
        %v1202 = vunpack.c.l.b16 %v1170
        %v1203 = vunpack.c.l.b16 %v1171
        %v1204 = vunpack.c.l.b16 %v1172
        %v1205 = vunpack.c.l.b16 %v1173
        %v1206 = vunpack.c.l.b16 %v1174
        %v1207 = vunpack.c.l.b16 %v1175
        %v1208 = vunpack.c.l.b16 %v1176
        %v1209 = vpack.c.b16 %v1194, %v1193
        %v1210 = vpack.c.b16 %v1196, %v1195
        %v1211 = vpack.c.b16 %v1198, %v1197
        %v1212 = vpack.c.b16 %v1200, %v1199
        %v1213 = vpack.c.b16 %v1202, %v1201
        %v1214 = vpack.c.b16 %v1204, %v1203
        %v1215 = vpack.c.b16 %v1206, %v1205
        %v1216 = vpack.c.b16 %v1208, %v1207
        %1225 = vmatprep.subr.bf16.mxu0 0
        %1226 = vmatpush1.bf16.msra.mxu0 %v1209
        %1227 = vmatprep.subr.bf16.mxu0 0
        %1228 = vmatpush1.bf16.msra.mxu0 %v1210
        %1229 = vmatprep.subr.bf16.mxu0 0
        %1230 = vmatpush1.bf16.msra.mxu0 %v1211
        %1231 = vmatprep.subr.bf16.mxu0 0
        %1232 = vmatpush1.bf16.msra.mxu0 %v1212
        %1233 = vmatprep.subr.bf16.mxu0 0
        %1234 = vmatpush1.bf16.msra.mxu0 %v1213
        %1235 = vmatprep.subr.bf16.mxu0 0
        %1236 = vmatpush1.bf16.msra.mxu0 %v1214
        %1237 = vmatprep.subr.bf16.mxu0 0
        %1238 = vmatpush1.bf16.msra.mxu0 %v1215
        %1239 = vmatprep.subr.bf16.mxu0 0
        %1240 = vmatpush1.bf16.msra.mxu0 %v1216
        %1241 = vmatprep.subr.bf16.mxu0 0
        %1242 = vmatpush1.bf16.msra.mxu0 0
        %1243 = vmatprep.subr.bf16.mxu0 0
        %1244 = vmatpush1.bf16.msra.mxu0 0
        %1245 = vmatprep.subr.bf16.mxu0 0
        %1246 = vmatpush1.bf16.msra.mxu0 0
        %1247 = vmatprep.subr.bf16.mxu0 0
        %1248 = vmatpush1.bf16.msra.mxu0 0
        %1249 = vmatprep.subr.bf16.mxu0 0
        %1250 = vmatpush1.bf16.msra.mxu0 0
        %1251 = vmatprep.subr.bf16.mxu0 0
        %1252 = vmatpush1.bf16.msra.mxu0 0
        %1253 = vmatprep.subr.bf16.mxu0 0
        %1254 = vmatpush1.bf16.msra.mxu0 0
        %1255 = vmatprep.subr.bf16.mxu0 0
        %1256 = vmatpush1.bf16.msra.mxu0 0
        %1257 = vmatprep.mubr.bf16.mxu0 0
        %1258 = vmatmul.mubr.bf16.gmra.mrb[0].mxu0 %v1098
        %v1259 = vpop.f32.mrb[0].mxu0
        %v1260 = vadd.f32 0.0, %v1259
        %v1261 = vpop.f32.mrb[0].mxu0
        %v1262 = vpop.f32.mrb[0].mxu0
        %v1263 = vadd.f32 0.0, %v1262
        %v1264 = vpop.f32.mrb[0].mxu0
        %1265 = vmatprep.mubr.bf16.mxu0 0
        %1266 = vmatmul.mubr.bf16.gmra.mrb[0].mxu0 %v1106
        %v1267 = vpop.f32.mrb[0].mxu0
        %v1268 = vadd.f32 0.0, %v1267
        %v1269 = vpop.f32.mrb[0].mxu0
        %v1270 = vpop.f32.mrb[0].mxu0
        %v1271 = vadd.f32 0.0, %v1270
        %v1272 = vpop.f32.mrb[0].mxu0
        %1273 = vmatprep.mubr.bf16.mxu0 0
        %1274 = vmatmul.mubr.bf16.gmra.mrb[0].mxu0 %v1114
        %v1275 = vpop.f32.mrb[0].mxu0
        %v1276 = vadd.f32 0.0, %v1275
        %v1277 = vpop.f32.mrb[0].mxu0
        %v1278 = vpop.f32.mrb[0].mxu0
        %v1279 = vadd.f32 0.0, %v1278
        %v1280 = vpop.f32.mrb[0].mxu0
        %1281 = vmatprep.mubr.bf16.mxu0 0
        %1282 = vmatmul.mubr.bf16.gmra.mrb[0].mxu0 %v1122
        %v1283 = vpop.f32.mrb[0].mxu0
        %v1284 = vadd.f32 0.0, %v1283
        %v1285 = vpop.f32.mrb[0].mxu0
        %v1286 = vpop.f32.mrb[0].mxu0
        %v1287 = vadd.f32 0.0, %v1286
        %v1288 = vpop.f32.mrb[0].mxu0
        %1289 = vmatprep.mubr.bf16.mxu0 0
        %1290 = vmatmul.mubr.bf16.gmra.mrb[0].mxu0 %v1130
        %v1291 = vpop.f32.mrb[0].mxu0
        %v1292 = vadd.f32 0.0, %v1291
        %v1293 = vpop.f32.mrb[0].mxu0
        %v1294 = vpop.f32.mrb[0].mxu0
        %v1295 = vadd.f32 0.0, %v1294
        %v1296 = vpop.f32.mrb[0].mxu0
        %1297 = vmatprep.mubr.bf16.mxu0 0
        %1298 = vmatmul.mubr.bf16.gmra.mrb[0].mxu0 %v1138
        %v1299 = vpop.f32.mrb[0].mxu0
        %v1300 = vadd.f32 0.0, %v1299
        %v1301 = vpop.f32.mrb[0].mxu0
        %v1302 = vpop.f32.mrb[0].mxu0
        %v1303 = vadd.f32 0.0, %v1302
        %v1304 = vpop.f32.mrb[0].mxu0
        %1305 = vmatprep.mubr.bf16.mxu0 0
        %1306 = vmatmul.mubr.bf16.gmra.mrb[0].mxu0 %v1146
        %v1307 = vpop.f32.mrb[0].mxu0
        %v1308 = vadd.f32 0.0, %v1307
        %v1309 = vpop.f32.mrb[0].mxu0
        %v1310 = vpop.f32.mrb[0].mxu0
        %v1311 = vadd.f32 0.0, %v1310
        %v1312 = vpop.f32.mrb[0].mxu0
        %1313 = vmatprep.mubr.bf16.mxu0 0
        %1314 = vmatmul.mubr.bf16.gmra.mrb[0].mxu0 %v1159
        %v1315 = vpop.f32.mrb[0].mxu0
        %v1316 = vadd.f32 0.0, %v1315
        %v1317 = vpop.f32.mrb[0].mxu0
        %v1318 = vpop.f32.mrb[0].mxu0
        %v1319 = vadd.f32 0.0, %v1318
        %v1320 = vpop.f32.mrb[0].mxu0
        %1321 = vdwg.mxu0
        %v1338 = vunpack.c.l.b16 %v1071
        %v1339 = vunpack.c.l.b16 %v1072
        %v1340 = vunpack.c.l.b16 %v1073
        %v1341 = vunpack.c.l.b16 %v1074
        %v1342 = vunpack.c.l.b16 %v1075
        %v1343 = vunpack.c.l.b16 %v1076
        %v1344 = vunpack.c.l.b16 %v1077
        %v1345 = vunpack.c.l.b16 %v1078
        %v1346 = vunpack.c.l.b16 %v1079
        %v1347 = vunpack.c.l.b16 %v1080
        %v1348 = vunpack.c.l.b16 %v1081
        %v1349 = vunpack.c.l.b16 %v1082
        %v1350 = vunpack.c.l.b16 %v1083
        %v1351 = vunpack.c.l.b16 %v1084
        %v1352 = vunpack.c.l.b16 %v1085
        %v1353 = vunpack.c.l.b16 %v1086
        %v1354 = vpack.c.b16 %v1339, %v1338
        %v1355 = vpack.c.b16 %v1341, %v1340
        %v1356 = vpack.c.b16 %v1343, %v1342
        %v1357 = vpack.c.b16 %v1345, %v1344
        %v1358 = vpack.c.b16 %v1347, %v1346
        %v1359 = vpack.c.b16 %v1349, %v1348
        %v1360 = vpack.c.b16 %v1351, %v1350
        %v1361 = vpack.c.b16 %v1353, %v1352
        %1370 = vmatprep.subr.bf16.mxu0 0
        %1371 = vmatpush1.bf16.msra.mxu0 %v1354
        %1372 = vmatprep.subr.bf16.mxu0 0
        %1373 = vmatpush1.bf16.msra.mxu0 %v1355
        %1374 = vmatprep.subr.bf16.mxu0 0
        %1375 = vmatpush1.bf16.msra.mxu0 %v1356
        %1376 = vmatprep.subr.bf16.mxu0 0
        %1377 = vmatpush1.bf16.msra.mxu0 %v1357
        %1378 = vmatprep.subr.bf16.mxu0 0
        %1379 = vmatpush1.bf16.msra.mxu0 %v1358
        %1380 = vmatprep.subr.bf16.mxu0 0
        %1381 = vmatpush1.bf16.msra.mxu0 %v1359
        %1382 = vmatprep.subr.bf16.mxu0 0
        %1383 = vmatpush1.bf16.msra.mxu0 %v1360
        %1384 = vmatprep.subr.bf16.mxu0 0
        %1385 = vmatpush1.bf16.msra.mxu0 %v1361
        %1386 = vmatprep.subr.bf16.mxu0 0
        %1387 = vmatpush1.bf16.msra.mxu0 0
        %1388 = vmatprep.subr.bf16.mxu0 0
        %1389 = vmatpush1.bf16.msra.mxu0 0
        %1390 = vmatprep.subr.bf16.mxu0 0
        %1391 = vmatpush1.bf16.msra.mxu0 0
        %1392 = vmatprep.subr.bf16.mxu0 0
        %1393 = vmatpush1.bf16.msra.mxu0 0
        %1394 = vmatprep.subr.bf16.mxu0 0
        %1395 = vmatpush1.bf16.msra.mxu0 0
        %1396 = vmatprep.subr.bf16.mxu0 0
        %1397 = vmatpush1.bf16.msra.mxu0 0
        %1398 = vmatprep.subr.bf16.mxu0 0
        %1399 = vmatpush1.bf16.msra.mxu0 0
        %1400 = vmatprep.subr.bf16.mxu0 0
        %1401 = vmatpush1.bf16.msra.mxu0 0
        %1402 = vmatprep.mubr.bf16.mxu0 0
        %1403 = vmatmul.mubr.bf16.gmra.mrb[0].mxu0 %v1063
        %v1404 = vpop.f32.mrb[0].mxu0
        %v1405 = vadd.f32 %v1260, %v1404
        %v1406 = vpop.f32.mrb[0].mxu0
        %v1407 = vpop.f32.mrb[0].mxu0
        %v1408 = vadd.f32 %v1263, %v1407
        %v1409 = vpop.f32.mrb[0].mxu0
        %1410 = vmatprep.mubr.bf16.mxu0 0
        %1411 = vmatmul.mubr.bf16.gmra.mrb[0].mxu0 %v1064
        %v1412 = vpop.f32.mrb[0].mxu0
        %v1413 = vadd.f32 %v1268, %v1412
        %v1414 = vpop.f32.mrb[0].mxu0
        %v1415 = vpop.f32.mrb[0].mxu0
        %v1416 = vadd.f32 %v1271, %v1415
        %v1417 = vpop.f32.mrb[0].mxu0
        %1418 = vmatprep.mubr.bf16.mxu0 0
        %1419 = vmatmul.mubr.bf16.gmra.mrb[0].mxu0 %v1065
        %v1420 = vpop.f32.mrb[0].mxu0
        %v1421 = vadd.f32 %v1276, %v1420
        %v1422 = vpop.f32.mrb[0].mxu0
        %v1423 = vpop.f32.mrb[0].mxu0
        %v1424 = vadd.f32 %v1279, %v1423
        %v1425 = vpop.f32.mrb[0].mxu0
        %1426 = vmatprep.mubr.bf16.mxu0 0
        %1427 = vmatmul.mubr.bf16.gmra.mrb[0].mxu0 %v1066
        %v1428 = vpop.f32.mrb[0].mxu0
        %v1429 = vadd.f32 %v1284, %v1428
        %v1430 = vpop.f32.mrb[0].mxu0
        %v1431 = vpop.f32.mrb[0].mxu0
        %v1432 = vadd.f32 %v1287, %v1431
        %v1433 = vpop.f32.mrb[0].mxu0
        %1434 = vmatprep.mubr.bf16.mxu0 0
        %1435 = vmatmul.mubr.bf16.gmra.mrb[0].mxu0 %v1067
        %v1436 = vpop.f32.mrb[0].mxu0
        %v1437 = vadd.f32 %v1292, %v1436
        %v1438 = vpop.f32.mrb[0].mxu0
        %v1439 = vpop.f32.mrb[0].mxu0
        %v1440 = vadd.f32 %v1295, %v1439
        %v1441 = vpop.f32.mrb[0].mxu0
        %1442 = vmatprep.mubr.bf16.mxu0 0
        %1443 = vmatmul.mubr.bf16.gmra.mrb[0].mxu0 %v1068
        %v1444 = vpop.f32.mrb[0].mxu0
        %v1445 = vadd.f32 %v1300, %v1444
        %v1446 = vpop.f32.mrb[0].mxu0
        %v1447 = vpop.f32.mrb[0].mxu0
        %v1448 = vadd.f32 %v1303, %v1447
        %v1449 = vpop.f32.mrb[0].mxu0
        %1450 = vmatprep.mubr.bf16.mxu0 0
        %1451 = vmatmul.mubr.bf16.gmra.mrb[0].mxu0 %v1069
        %v1452 = vpop.f32.mrb[0].mxu0
        %v1453 = vadd.f32 %v1308, %v1452
        %v1454 = vpop.f32.mrb[0].mxu0
        %v1455 = vpop.f32.mrb[0].mxu0
        %v1456 = vadd.f32 %v1311, %v1455
        %v1457 = vpop.f32.mrb[0].mxu0
        %1458 = vmatprep.mubr.bf16.mxu0 0
        %1459 = vmatmul.mubr.bf16.gmra.mrb[0].mxu0 %v1070
        %v1460 = vpop.f32.mrb[0].mxu0
        %v1461 = vadd.f32 %v1316, %v1460
        %v1462 = vpop.f32.mrb[0].mxu0
        %v1463 = vpop.f32.mrb[0].mxu0
        %v1464 = vadd.f32 %v1319, %v1463
        %v1465 = vpop.f32.mrb[0].mxu0
        %1466 = vdwg.mxu0
        %v1475 = vrot.slane %v1063, 1
        %v1476 = vrot.slane %v1064, 1
        %v1477 = vsel %vm817, %v1475, %v1476
        %v1478 = vrot.slane %v1065, 1
        %v1479 = vsel %vm817, %v1476, %v1478
        %v1480 = vrot.slane %v1066, 1
        %v1481 = vsel %vm817, %v1478, %v1480
        %v1482 = vrot.slane %v1067, 1
        %v1483 = vsel %vm817, %v1480, %v1482
        %v1484 = vrot.slane %v1068, 1
        %v1485 = vsel %vm817, %v1482, %v1484
        %v1486 = vrot.slane %v1069, 1
        %v1487 = vsel %vm817, %v1484, %v1486
        %v1488 = vrot.slane %v1070, 1
        %v1489 = vsel %vm817, %v1486, %v1488
        %v1499 = vsel %vm841, %v1488, %v1475
        %s1501 = scalar_lea.vmem [#allocation5], 128
        %v1502 = vld [vmem:[%s1501] sm:$0xf]
        %v1503 = vld [vmem:[%s1501 + $0x4] sm:$0xf]
        %v1504 = vld [vmem:[%s1501 + $0x8] sm:$0xf]
        %v1505 = vld [vmem:[%s1501 + $0xc] sm:$0xf]
        %v1506 = vld [vmem:[%s1501 + $0x10] sm:$0xf]
        %v1507 = vld [vmem:[%s1501 + $0x14] sm:$0xf]
        %v1508 = vld [vmem:[%s1501 + $0x18] sm:$0xf]
        %v1509 = vld [vmem:[%s1501 + $0x1c] sm:$0xf]
        %v1510 = vld [vmem:[%s1501 + $0x20] sm:$0xf]
        %v1511 = vld [vmem:[%s1501 + $0x24] sm:$0xf]
        %v1512 = vld [vmem:[%s1501 + $0x28] sm:$0xf]
        %v1513 = vld [vmem:[%s1501 + $0x2c] sm:$0xf]
        %v1514 = vld [vmem:[%s1501 + $0x30] sm:$0xf]
        %v1515 = vld [vmem:[%s1501 + $0x34] sm:$0xf]
        %v1516 = vld [vmem:[%s1501 + $0x38] sm:$0xf]
        %v1517 = vld [vmem:[%s1501 + $0x3c] sm:$0xf]
        %v1534 = vunpack.c.l.b16 %v1502
        %v1535 = vunpack.c.l.b16 %v1503
        %v1536 = vunpack.c.l.b16 %v1504
        %v1537 = vunpack.c.l.b16 %v1505
        %v1538 = vunpack.c.l.b16 %v1506
        %v1539 = vunpack.c.l.b16 %v1507
        %v1540 = vunpack.c.l.b16 %v1508
        %v1541 = vunpack.c.l.b16 %v1509
        %v1542 = vunpack.c.l.b16 %v1510
        %v1543 = vunpack.c.l.b16 %v1511
        %v1544 = vunpack.c.l.b16 %v1512
        %v1545 = vunpack.c.l.b16 %v1513
        %v1546 = vunpack.c.l.b16 %v1514
        %v1547 = vunpack.c.l.b16 %v1515
        %v1548 = vunpack.c.l.b16 %v1516
        %v1549 = vunpack.c.l.b16 %v1517
        %v1550 = vpack.c.b16 %v1535, %v1534
        %v1551 = vpack.c.b16 %v1537, %v1536
        %v1552 = vpack.c.b16 %v1539, %v1538
        %v1553 = vpack.c.b16 %v1541, %v1540
        %v1554 = vpack.c.b16 %v1543, %v1542
        %v1555 = vpack.c.b16 %v1545, %v1544
        %v1556 = vpack.c.b16 %v1547, %v1546
        %v1557 = vpack.c.b16 %v1549, %v1548
        %1566 = vmatprep.subr.bf16.mxu0 0
        %1567 = vmatpush1.bf16.msra.mxu0 %v1550
        %1568 = vmatprep.subr.bf16.mxu0 0
        %1569 = vmatpush1.bf16.msra.mxu0 %v1551
        %1570 = vmatprep.subr.bf16.mxu0 0
        %1571 = vmatpush1.bf16.msra.mxu0 %v1552
        %1572 = vmatprep.subr.bf16.mxu0 0
        %1573 = vmatpush1.bf16.msra.mxu0 %v1553
        %1574 = vmatprep.subr.bf16.mxu0 0
        %1575 = vmatpush1.bf16.msra.mxu0 %v1554
        %1576 = vmatprep.subr.bf16.mxu0 0
        %1577 = vmatpush1.bf16.msra.mxu0 %v1555
        %1578 = vmatprep.subr.bf16.mxu0 0
        %1579 = vmatpush1.bf16.msra.mxu0 %v1556
        %1580 = vmatprep.subr.bf16.mxu0 0
        %1581 = vmatpush1.bf16.msra.mxu0 %v1557
        %1582 = vmatprep.subr.bf16.mxu0 0
        %1583 = vmatpush1.bf16.msra.mxu0 0
        %1584 = vmatprep.subr.bf16.mxu0 0
        %1585 = vmatpush1.bf16.msra.mxu0 0
        %1586 = vmatprep.subr.bf16.mxu0 0
        %1587 = vmatpush1.bf16.msra.mxu0 0
        %1588 = vmatprep.subr.bf16.mxu0 0
        %1589 = vmatpush1.bf16.msra.mxu0 0
        %1590 = vmatprep.subr.bf16.mxu0 0
        %1591 = vmatpush1.bf16.msra.mxu0 0
        %1592 = vmatprep.subr.bf16.mxu0 0
        %1593 = vmatpush1.bf16.msra.mxu0 0
        %1594 = vmatprep.subr.bf16.mxu0 0
        %1595 = vmatpush1.bf16.msra.mxu0 0
        %1596 = vmatprep.subr.bf16.mxu0 0
        %1597 = vmatpush1.bf16.msra.mxu0 0
        %1598 = vmatprep.mubr.bf16.mxu0 0
        %1599 = vmatmul.mubr.bf16.gmra.mrb[0].mxu0 %v1477
        %v1600 = vpop.f32.mrb[0].mxu0
        %v1601 = vadd.f32 0.0, %v1600
        %v1602 = vpop.f32.mrb[0].mxu0
        %v1603 = vpop.f32.mrb[0].mxu0
        %v1604 = vadd.f32 0.0, %v1603
        %v1605 = vpop.f32.mrb[0].mxu0
        %1606 = vmatprep.mubr.bf16.mxu0 0
        %1607 = vmatmul.mubr.bf16.gmra.mrb[0].mxu0 %v1479
        %v1608 = vpop.f32.mrb[0].mxu0
        %v1609 = vadd.f32 0.0, %v1608
        %v1610 = vpop.f32.mrb[0].mxu0
        %v1611 = vpop.f32.mrb[0].mxu0
        %v1612 = vadd.f32 0.0, %v1611
        %v1613 = vpop.f32.mrb[0].mxu0
        %1614 = vmatprep.mubr.bf16.mxu0 0
        %1615 = vmatmul.mubr.bf16.gmra.mrb[0].mxu0 %v1481
        %v1616 = vpop.f32.mrb[0].mxu0
        %v1617 = vadd.f32 0.0, %v1616
        %v1618 = vpop.f32.mrb[0].mxu0
        %v1619 = vpop.f32.mrb[0].mxu0
        %v1620 = vadd.f32 0.0, %v1619
        %v1621 = vpop.f32.mrb[0].mxu0
        %1622 = vmatprep.mubr.bf16.mxu0 0
        %1623 = vmatmul.mubr.bf16.gmra.mrb[0].mxu0 %v1483
        %v1624 = vpop.f32.mrb[0].mxu0
        %v1625 = vadd.f32 0.0, %v1624
        %v1626 = vpop.f32.mrb[0].mxu0
        %v1627 = vpop.f32.mrb[0].mxu0
        %v1628 = vadd.f32 0.0, %v1627
        %v1629 = vpop.f32.mrb[0].mxu0
        %1630 = vmatprep.mubr.bf16.mxu0 0
        %1631 = vmatmul.mubr.bf16.gmra.mrb[0].mxu0 %v1485
        %v1632 = vpop.f32.mrb[0].mxu0
        %v1633 = vadd.f32 0.0, %v1632
        %v1634 = vpop.f32.mrb[0].mxu0
        %v1635 = vpop.f32.mrb[0].mxu0
        %v1636 = vadd.f32 0.0, %v1635
        %v1637 = vpop.f32.mrb[0].mxu0
        %1638 = vmatprep.mubr.bf16.mxu0 0
        %1639 = vmatmul.mubr.bf16.gmra.mrb[0].mxu0 %v1487
        %v1640 = vpop.f32.mrb[0].mxu0
        %v1641 = vadd.f32 0.0, %v1640
        %v1642 = vpop.f32.mrb[0].mxu0
        %v1643 = vpop.f32.mrb[0].mxu0
        %v1644 = vadd.f32 0.0, %v1643
        %v1645 = vpop.f32.mrb[0].mxu0
        %1646 = vmatprep.mubr.bf16.mxu0 0
        %1647 = vmatmul.mubr.bf16.gmra.mrb[0].mxu0 %v1489
        %v1648 = vpop.f32.mrb[0].mxu0
        %v1649 = vadd.f32 0.0, %v1648
        %v1650 = vpop.f32.mrb[0].mxu0
        %v1651 = vpop.f32.mrb[0].mxu0
        %v1652 = vadd.f32 0.0, %v1651
        %v1653 = vpop.f32.mrb[0].mxu0
        %1654 = vmatprep.mubr.bf16.mxu0 0
        %1655 = vmatmul.mubr.bf16.gmra.mrb[0].mxu0 %v1499
        %v1656 = vpop.f32.mrb[0].mxu0
        %v1657 = vadd.f32 0.0, %v1656
        %v1658 = vpop.f32.mrb[0].mxu0
        %v1659 = vpop.f32.mrb[0].mxu0
        %v1660 = vadd.f32 0.0, %v1659
        %v1661 = vpop.f32.mrb[0].mxu0
        %1662 = vdwg.mxu0
        %v1663 = vadd.f32 %v1405, %v1601
        %v1664 = vadd.f32 %v1408, %v1604
        %v1665 = vadd.f32 %v1413, %v1609
        %v1666 = vadd.f32 %v1416, %v1612
        %v1667 = vadd.f32 %v1421, %v1617
        %v1668 = vadd.f32 %v1424, %v1620
        %v1669 = vadd.f32 %v1429, %v1625
        %v1670 = vadd.f32 %v1432, %v1628
        %v1671 = vadd.f32 %v1437, %v1633
        %v1672 = vadd.f32 %v1440, %v1636
        %v1673 = vadd.f32 %v1445, %v1641
        %v1674 = vadd.f32 %v1448, %v1644
        %v1675 = vadd.f32 %v1453, %v1649
        %v1676 = vadd.f32 %v1456, %v1652
        %v1677 = vadd.f32 %v1461, %v1657
        %v1678 = vadd.f32 %v1464, %v1660
        %v1679 = vld [vmem:[%s5] sm:$0x1]
        %v1681 = vlaneseq
        %v1682 = vshrl.u32 %v1681, 7
        %v1683 = vsub.s32 0, %v1682
        %v1684 = vrot.slane %v1679, %v1683
        %v1686 = vadd.f32 %v1663, %v1684
        %v1687 = vadd.f32 %v1664, %v1684
        %v1688 = vadd.f32 %v1665, %v1684
        %v1689 = vadd.f32 %v1666, %v1684
        %v1690 = vadd.f32 %v1667, %v1684
        %v1691 = vadd.f32 %v1668, %v1684
        %v1692 = vadd.f32 %v1669, %v1684
        %v1693 = vadd.f32 %v1670, %v1684
        %v1694 = vadd.f32 %v1671, %v1684
        %v1695 = vadd.f32 %v1672, %v1684
        %v1696 = vadd.f32 %v1673, %v1684
        %v1697 = vadd.f32 %v1674, %v1684
        %v1698 = vadd.f32 %v1675, %v1684
        %v1699 = vadd.f32 %v1676, %v1684
        %v1700 = vadd.f32 %v1677, %v1684
        %v1701 = vadd.f32 %v1678, %v1684
        %v1702 = vmax.f32 %v1686, 0.0
        %v1703 = vmax.f32 %v1687, 0.0
        %v1704 = vmax.f32 %v1688, 0.0
        %v1705 = vmax.f32 %v1689, 0.0
        %v1706 = vmax.f32 %v1690, 0.0
        %v1707 = vmax.f32 %v1691, 0.0
        %v1708 = vmax.f32 %v1692, 0.0
        %v1709 = vmax.f32 %v1693, 0.0
        %v1710 = vmax.f32 %v1694, 0.0
        %v1711 = vmax.f32 %v1695, 0.0
        %v1712 = vmax.f32 %v1696, 0.0
        %v1713 = vmax.f32 %v1697, 0.0
        %v1714 = vmax.f32 %v1698, 0.0
        %v1715 = vmax.f32 %v1699, 0.0
        %v1716 = vmax.f32 %v1700, 0.0
        %v1717 = vmax.f32 %v1701, 0.0
        %v1718 = vpack.c.bf16 %v1703, %v1702
        %v1719 = vpack.c.bf16 %v1705, %v1704
        %v1720 = vpack.c.bf16 %v1707, %v1706
        %v1721 = vpack.c.bf16 %v1709, %v1708
        %v1722 = vpack.c.bf16 %v1711, %v1710
        %v1723 = vpack.c.bf16 %v1713, %v1712
        %v1724 = vpack.c.bf16 %v1715, %v1714
        %v1725 = vpack.c.bf16 %v1717, %v1716
        %v1734 = vunpack.c.l.b16 %v1718
        %v1735 = vunpack.c.h.b16 %v1718
        %v1736 = vunpack.c.l.b16 %v1719
        %v1737 = vunpack.c.h.b16 %v1719
        %v1738 = vunpack.c.l.b16 %v1720
        %v1739 = vunpack.c.h.b16 %v1720
        %v1740 = vunpack.c.l.b16 %v1721
        %v1741 = vunpack.c.h.b16 %v1721
        %v1742 = vunpack.c.l.b16 %v1722
        %v1743 = vunpack.c.h.b16 %v1722
        %v1744 = vunpack.c.l.b16 %v1723
        %v1745 = vunpack.c.h.b16 %v1723
        %v1746 = vunpack.c.l.b16 %v1724
        %v1747 = vunpack.c.h.b16 %v1724
        %v1748 = vunpack.c.l.b16 %v1725
        %v1749 = vunpack.c.h.b16 %v1725
        %v1750 = vpack.c.b16 %v1734, %v1734
        %v1751 = vpack.c.b16 %v1735, %v1735
        %v1752 = vpack.c.b16 %v1736, %v1736
        %v1753 = vpack.c.b16 %v1737, %v1737
        %v1754 = vpack.c.b16 %v1738, %v1738
        %v1755 = vpack.c.b16 %v1739, %v1739
        %v1756 = vpack.c.b16 %v1740, %v1740
        %v1757 = vpack.c.b16 %v1741, %v1741
        %v1758 = vpack.c.b16 %v1742, %v1742
        %v1759 = vpack.c.b16 %v1743, %v1743
        %v1760 = vpack.c.b16 %v1744, %v1744
        %v1761 = vpack.c.b16 %v1745, %v1745
        %v1762 = vpack.c.b16 %v1746, %v1746
        %v1763 = vpack.c.b16 %v1747, %v1747
        %v1764 = vpack.c.b16 %v1748, %v1748
        %v1765 = vpack.c.b16 %v1749, %v1749
        %1782 = vst [vmem:[%s338] sm:$0xf] %v1750
        %1783 = vst [vmem:[%s338 + $0x4] sm:$0xf] %v1751
        %1784 = vst [vmem:[%s338 + $0x8] sm:$0xf] %v1752
        %1785 = vst [vmem:[%s338 + $0xc] sm:$0xf] %v1753
        %1786 = vst [vmem:[%s338 + $0x10] sm:$0xf] %v1754
        %1787 = vst [vmem:[%s338 + $0x14] sm:$0xf] %v1755
        %1788 = vst [vmem:[%s338 + $0x18] sm:$0xf] %v1756
        %1789 = vst [vmem:[%s338 + $0x1c] sm:$0xf] %v1757
        %1790 = vst [vmem:[%s338 + $0x20] sm:$0xf] %v1758
        %1791 = vst [vmem:[%s338 + $0x24] sm:$0xf] %v1759
        %1792 = vst [vmem:[%s338 + $0x28] sm:$0xf] %v1760
        %1793 = vst [vmem:[%s338 + $0x2c] sm:$0xf] %v1761
        %1794 = vst [vmem:[%s338 + $0x30] sm:$0xf] %v1762
        %1795 = vst [vmem:[%s338 + $0x34] sm:$0xf] %v1763
        %1796 = vst [vmem:[%s338 + $0x38] sm:$0xf] %v1764
        %1797 = vst [vmem:[%s338 + $0x3c] sm:$0xf] %v1765
        %v1798 = vld [vmem:[%s344] sm:$0xff]
        %v1799 = vld [vmem:[%s344 + $0x8] sm:$0xff]
        %v1800 = vld [vmem:[%s344 + $0x10] sm:$0xff]
        %v1801 = vld [vmem:[%s344 + $0x18] sm:$0xff]
        %v1802 = vld [vmem:[%s344 + $0x20] sm:$0xff]
        %v1803 = vld [vmem:[%s344 + $0x28] sm:$0xff]
        %v1804 = vld [vmem:[%s344 + $0x30] sm:$0xff]
        %v1805 = vld [vmem:[%s344 + $0x38] sm:$0xff]
        %v1806 = vld [vmem:[%s344 + $0x40] sm:$0xff]
        %v1807 = vld [vmem:[%s344 + $0x48] sm:$0xff]
        %v1808 = vld [vmem:[%s344 + $0x50] sm:$0xff]
        %v1809 = vld [vmem:[%s344 + $0x58] sm:$0xff]
        %v1810 = vld [vmem:[%s344 + $0x60] sm:$0xff]
        %v1811 = vld [vmem:[%s344 + $0x68] sm:$0xff]
        %v1812 = vld [vmem:[%s344 + $0x70] sm:$0xff]
        %v1813 = vld [vmem:[%s344 + $0x78] sm:$0xff]
        %vm1814 = vcmp.gt.f32.partialorder %v1798, 0.0
        %vm1815 = vcmp.gt.f32.partialorder %v1799, 0.0
        %vm1816 = vcmp.gt.f32.partialorder %v1800, 0.0
        %vm1817 = vcmp.gt.f32.partialorder %v1801, 0.0
        %vm1818 = vcmp.gt.f32.partialorder %v1802, 0.0
        %vm1819 = vcmp.gt.f32.partialorder %v1803, 0.0
        %vm1820 = vcmp.gt.f32.partialorder %v1804, 0.0
        %vm1821 = vcmp.gt.f32.partialorder %v1805, 0.0
        %vm1822 = vcmp.gt.f32.partialorder %v1806, 0.0
        %vm1823 = vcmp.gt.f32.partialorder %v1807, 0.0
        %vm1824 = vcmp.gt.f32.partialorder %v1808, 0.0
        %vm1825 = vcmp.gt.f32.partialorder %v1809, 0.0
        %vm1826 = vcmp.gt.f32.partialorder %v1810, 0.0
        %vm1827 = vcmp.gt.f32.partialorder %v1811, 0.0
        %vm1828 = vcmp.gt.f32.partialorder %v1812, 0.0
        %vm1829 = vcmp.gt.f32.partialorder %v1813, 0.0
        %v1830 = vsel %vm1814, 1, 0
        %v1831 = vsel %vm1815, 1, 0
        %v1832 = vsel %vm1816, 1, 0
        %v1833 = vsel %vm1817, 1, 0
        %v1834 = vsel %vm1818, 1, 0
        %v1835 = vsel %vm1819, 1, 0
        %v1836 = vsel %vm1820, 1, 0
        %v1837 = vsel %vm1821, 1, 0
        %v1838 = vsel %vm1822, 1, 0
        %v1839 = vsel %vm1823, 1, 0
        %v1840 = vsel %vm1824, 1, 0
        %v1841 = vsel %vm1825, 1, 0
        %v1842 = vsel %vm1826, 1, 0
        %v1843 = vsel %vm1827, 1, 0
        %v1844 = vsel %vm1828, 1, 0
        %v1845 = vsel %vm1829, 1, 0
        %1846 = vset.pattern.permute.xlu0 0
        %1847 = vperm.xlu0 %1846, %v1830
        %v1848 = vpop.permute.xlu0 %1847
        %1849 = vset.pattern.permute.xlu0 0
        %1850 = vperm.xlu0 %1849, %v1831
        %v1851 = vpop.permute.xlu0 %1850
        %1852 = vset.pattern.permute.xlu0 0
        %1853 = vperm.xlu0 %1852, %v1832
        %v1854 = vpop.permute.xlu0 %1853
        %1855 = vset.pattern.permute.xlu0 0
        %1856 = vperm.xlu0 %1855, %v1833
        %v1857 = vpop.permute.xlu0 %1856
        %1858 = vset.pattern.permute.xlu0 0
        %1859 = vperm.xlu0 %1858, %v1834
        %v1860 = vpop.permute.xlu0 %1859
        %1861 = vset.pattern.permute.xlu0 0
        %1862 = vperm.xlu0 %1861, %v1835
        %v1863 = vpop.permute.xlu0 %1862
        %1864 = vset.pattern.permute.xlu0 0
        %1865 = vperm.xlu0 %1864, %v1836
        %v1866 = vpop.permute.xlu0 %1865
        %1867 = vset.pattern.permute.xlu0 0
        %1868 = vperm.xlu0 %1867, %v1837
        %v1869 = vpop.permute.xlu0 %1868
        %1870 = vset.pattern.permute.xlu0 0
        %1871 = vperm.xlu0 %1870, %v1838
        %v1872 = vpop.permute.xlu0 %1871
        %1873 = vset.pattern.permute.xlu0 0
        %1874 = vperm.xlu0 %1873, %v1839
        %v1875 = vpop.permute.xlu0 %1874
        %1876 = vset.pattern.permute.xlu0 0
        %1877 = vperm.xlu0 %1876, %v1840
        %v1878 = vpop.permute.xlu0 %1877
        %1879 = vset.pattern.permute.xlu0 0
        %1880 = vperm.xlu0 %1879, %v1841
        %v1881 = vpop.permute.xlu0 %1880
        %1882 = vset.pattern.permute.xlu0 0
        %1883 = vperm.xlu0 %1882, %v1842
        %v1884 = vpop.permute.xlu0 %1883
        %1885 = vset.pattern.permute.xlu0 0
        %1886 = vperm.xlu0 %1885, %v1843
        %v1887 = vpop.permute.xlu0 %1886
        %1888 = vset.pattern.permute.xlu0 0
        %1889 = vperm.xlu0 %1888, %v1844
        %v1890 = vpop.permute.xlu0 %1889
        %1891 = vset.pattern.permute.xlu0 0
        %1892 = vperm.xlu0 %1891, %v1845
        %v1893 = vpop.permute.xlu0 %1892
        %vm1894 = vcmp.eq.s32.totalorder %v1848, 1
        %vm1895 = vcmp.eq.s32.totalorder %v1851, 1
        %vm1896 = vcmp.eq.s32.totalorder %v1854, 1
        %vm1897 = vcmp.eq.s32.totalorder %v1857, 1
        %vm1898 = vcmp.eq.s32.totalorder %v1860, 1
        %vm1899 = vcmp.eq.s32.totalorder %v1863, 1
        %vm1900 = vcmp.eq.s32.totalorder %v1866, 1
        %vm1901 = vcmp.eq.s32.totalorder %v1869, 1
        %vm1902 = vcmp.eq.s32.totalorder %v1872, 1
        %vm1903 = vcmp.eq.s32.totalorder %v1875, 1
        %vm1904 = vcmp.eq.s32.totalorder %v1878, 1
        %vm1905 = vcmp.eq.s32.totalorder %v1881, 1
        %vm1906 = vcmp.eq.s32.totalorder %v1884, 1
        %vm1907 = vcmp.eq.s32.totalorder %v1887, 1
        %vm1908 = vcmp.eq.s32.totalorder %v1890, 1
        %vm1909 = vcmp.eq.s32.totalorder %v1893, 1
        %v1910 = vsel %vm1894, %v1702, 0.0
        %v1911 = vsel %vm1895, %v1703, 0.0
        %v1912 = vsel %vm1896, %v1704, 0.0
        %v1913 = vsel %vm1897, %v1705, 0.0
        %v1914 = vsel %vm1898, %v1706, 0.0
        %v1915 = vsel %vm1899, %v1707, 0.0
        %v1916 = vsel %vm1900, %v1708, 0.0
        %v1917 = vsel %vm1901, %v1709, 0.0
        %v1918 = vsel %vm1902, %v1710, 0.0
        %v1919 = vsel %vm1903, %v1711, 0.0
        %v1920 = vsel %vm1904, %v1712, 0.0
        %v1921 = vsel %vm1905, %v1713, 0.0
        %v1922 = vsel %vm1906, %v1714, 0.0
        %v1923 = vsel %vm1907, %v1715, 0.0
        %v1924 = vsel %vm1908, %v1716, 0.0
        %v1925 = vsel %vm1909, %v1717, 0.0
        %v1926 = vmax.f32 %v1910, %v1911
        %v1927 = vrot.slane %v1926, 4
        %v1928 = vmax.f32 %v1926, %v1927
        %v1929 = vrot.slane %v1928, 2
        %v1930 = vmax.f32 %v1928, %v1929
        %v1931 = vrot.slane %v1930, 1
        %v1932 = vmax.f32 %v1930, %v1931
        %v1933 = vmax.f32 %v1912, %v1913
        %v1934 = vrot.slane %v1933, 4
        %v1935 = vmax.f32 %v1933, %v1934
        %v1936 = vrot.slane %v1935, 2
        %v1937 = vmax.f32 %v1935, %v1936
        %v1938 = vrot.slane %v1937, 1
        %v1939 = vmax.f32 %v1937, %v1938
        %v1940 = vmax.f32 %v1914, %v1915
        %v1941 = vrot.slane %v1940, 4
        %v1942 = vmax.f32 %v1940, %v1941
        %v1943 = vrot.slane %v1942, 2
        %v1944 = vmax.f32 %v1942, %v1943
        %v1945 = vrot.slane %v1944, 1
        %v1946 = vmax.f32 %v1944, %v1945
        %v1947 = vmax.f32 %v1916, %v1917
        %v1948 = vrot.slane %v1947, 4
        %v1949 = vmax.f32 %v1947, %v1948
        %v1950 = vrot.slane %v1949, 2
        %v1951 = vmax.f32 %v1949, %v1950
        %v1952 = vrot.slane %v1951, 1
        %v1953 = vmax.f32 %v1951, %v1952
        %v1954 = vmax.f32 %v1918, %v1919
        %v1955 = vrot.slane %v1954, 4
        %v1956 = vmax.f32 %v1954, %v1955
        %v1957 = vrot.slane %v1956, 2
        %v1958 = vmax.f32 %v1956, %v1957
        %v1959 = vrot.slane %v1958, 1
        %v1960 = vmax.f32 %v1958, %v1959
        %v1961 = vmax.f32 %v1920, %v1921
        %v1962 = vrot.slane %v1961, 4
        %v1963 = vmax.f32 %v1961, %v1962
        %v1964 = vrot.slane %v1963, 2
        %v1965 = vmax.f32 %v1963, %v1964
        %v1966 = vrot.slane %v1965, 1
        %v1967 = vmax.f32 %v1965, %v1966
        %v1968 = vmax.f32 %v1922, %v1923
        %v1969 = vrot.slane %v1968, 4
        %v1970 = vmax.f32 %v1968, %v1969
        %v1971 = vrot.slane %v1970, 2
        %v1972 = vmax.f32 %v1970, %v1971
        %v1973 = vrot.slane %v1972, 1
        %v1974 = vmax.f32 %v1972, %v1973
        %v1975 = vmax.f32 %v1924, %v1925
        %v1976 = vrot.slane %v1975, 4
        %v1977 = vmax.f32 %v1975, %v1976
        %v1978 = vrot.slane %v1977, 2
        %v1979 = vmax.f32 %v1977, %v1978
        %v1980 = vrot.slane %v1979, 1
        %v1981 = vmax.f32 %v1979, %v1980
        %1982 = vst [vmem:[%s331] sm:$0x1] %v1932
        %1983 = vst [vmem:[%s331 + $0x1] sm:$0x1] %v1939
        %1984 = vst [vmem:[%s331 + $0x2] sm:$0x1] %v1946
        %1985 = vst [vmem:[%s331 + $0x3] sm:$0x1] %v1953
        %1986 = vst [vmem:[%s331 + $0x4] sm:$0x1] %v1960
        %1987 = vst [vmem:[%s331 + $0x5] sm:$0x1] %v1967
        %1988 = vst [vmem:[%s331 + $0x6] sm:$0x1] %v1974
        %1989 = vst [vmem:[%s331 + $0x7] sm:$0x1] %v1981
        %s1990 = sand.u32 %s173, 1
        %s1991 = scalar_lea.sflag [#allocation4], %s1990
        %s1992 = sand.u32 %s173, 1
        %s1993 = smul.addr %s1992, 8
        %s1994 = scalar_lea.vmem [#allocation7], %s1993
        %s1995 = sand.u32 %s199, 1
        %s1996 = scalar_lea.sflag [#allocation9], %s1995
        %s1997 = sand.u32 %s199, 1
        %s1998 = smul.addr %s1997, 64
        %s1999 = scalar_lea.vmem [#allocation8], %s1998
        // Predicated region
        $region53: #{tpu_custom_call.1} parent=43 // pred_check
          %p2000 = pneg %p183
        $region54: #{tpu_custom_call.1} parent=43 // pred_check_branch
          %2002 = sbr.rel (%p2000) target = $region56
        $region55: #{tpu_custom_call.1} parent=43 // pred_region
          %s2003 = smul.u32 8, %s29
          %s2005 = ssub.s32 128, 128
          %2006 = vsyncadd %s1991, %s2005
          %s2007 = smul.addr %s2003, 16
          %s2008 = scalar_lea.hbm %s6, %s2007
          %s2009 = sshll.u32 %s1994, 4
          %s2010 = int_to_ptr.vmem [resolvable:$true] %s2009
          %2015 = dma.vmem_to_hbm [thread:$0]  %s2010, 128, %s2008, %s1991, 16, 16, 1
        $region56: #{tpu_custom_call.1} parent=43 // pred_fallthru
          _
        // Predicated region
        $region57: #{tpu_custom_call.1} parent=43 // pred_check
          %p2016 = pneg %p209
        $region58: #{tpu_custom_call.1} parent=43 // pred_check_branch
          %2018 = sbr.rel (%p2016) target = $region60
        $region59: #{tpu_custom_call.1} parent=43 // pred_region
          %s2019 = smul.u32 16, %s29
          %s2021 = ssub.s32 1024, 1024
          %2022 = vsyncadd %s1996, %s2021
          %s2023 = smul.addr %s2019, 64
          %s2024 = scalar_lea.hbm %s7, %s2023
          %s2025 = sshll.u32 %s1999, 4
          %s2026 = int_to_ptr.vmem [resolvable:$true] %s2025
          %2031 = dma.vmem_to_hbm [thread:$0]  %s2026, 1024, %s2024, %s1996, 64, 64, 4
        $region60: #{tpu_custom_call.1} parent=43 // pred_fallthru
          _
      $region44: #{tpu_custom_call.1} parent=5 // pred_fallthru
        _
      %p2032 = scmp.le.s32.totalorder 2, %s24
      // Predicated region
      $region61: #{tpu_custom_call.1} parent=5 // pred_check
        %p2033 = pneg %p2032
      $region62: #{tpu_custom_call.1} parent=5 // pred_check_branch
        %2035 = sbr.rel (%p2033) target = $region64
      $region63: #{tpu_custom_call.1} parent=5 // pred_region
        %s2036 = ssub.s32 %s24, 2
        // Predicated region
        $region65: #{tpu_custom_call.1} parent=63 // pred_check
          %p2037 = pneg %p189
        $region66: #{tpu_custom_call.1} parent=63 // pred_check_branch
          %2039 = sbr.rel (%p2037) target = $region68
        $region67: #{tpu_custom_call.1} parent=63 // pred_region
          %s2040 = sand.u32 %s174, 1
          %s2041 = scalar_lea.sflag [#allocation4], %s2040
          %s2042 = sand.u32 %s174, 1
          %s2043 = smul.addr %s2042, 8
          %s2044 = scalar_lea.vmem [#allocation7], %s2043
          %2045 = dma.done %s2041, 128
        $region68: #{tpu_custom_call.1} parent=63 // pred_fallthru
          _
        // Predicated region
        $region69: #{tpu_custom_call.1} parent=63 // pred_check
          %p2046 = pneg %p215
        $region70: #{tpu_custom_call.1} parent=63 // pred_check_branch
          %2048 = sbr.rel (%p2046) target = $region72
        $region71: #{tpu_custom_call.1} parent=63 // pred_region
          %s2049 = sand.u32 %s200, 1
          %s2050 = scalar_lea.sflag [#allocation9], %s2049
          %s2051 = sand.u32 %s200, 1
          %s2052 = smul.addr %s2051, 64
          %s2053 = scalar_lea.vmem [#allocation8], %s2052
          %2054 = dma.done %s2050, 1024
        $region72: #{tpu_custom_call.1} parent=63 // pred_fallthru
          _
      $region64: #{tpu_custom_call.1} parent=5 // pred_fallthru
        _
    $region6: #{tpu_custom_call.1} parent=1 // loop_footer
      %s28 = sadd.s32 1, %s24
    $region7: #{tpu_custom_call.1} parent=1 // loop_footer_branch
      %23 = sbr.rel target = $region3
    $region8: #{tpu_custom_call.1} parent=1 // loop_exit
      _
    %2055 = vsyncpa [#allocation3], 1
    %s2056 = scalar_lea.sflag [#allocation3], 1
    %2057 = vsyncpa %s2056, 1
    %2058 = vsyncpa [#allocation6], 1
    %2059 = vsyncpa [#allocation4], 1
    %s2060 = scalar_lea.sflag [#allocation4], 1
    %2061 = vsyncpa %s2060, 1
    %2062 = vsyncpa [#allocation9], 1
    %s2063 = scalar_lea.sflag [#allocation9], 1
    %2064 = vsyncpa %s2063, 1

</llo_original>
